<compile_context>
chip_gen: v6e
topology: v6e:2x2x1
jax: 0.10.0
libtpu: 0.0.40
codegen_flags: <defaults>
</compile_context>

<pallas_src>
import functools

import jax
import jax.numpy as jnp
from jax.experimental import pallas as pl
from jax.experimental.pallas import tpu as pltpu


# ----------------------------- config (small) -----------------------------
BATCH = 2
CITY_T = 8
SLOTS = 3            # env features = slots * 2 = 6
EMBED = 32           # embed must equal hidden for the bmm(V, tanh(.)) in glimpse
HIDDEN = 32
N_GLIMPSE = 1
N_PROCESS = 2
INIT_MIN, INIT_MAX = -0.08, 0.08


def _sigmoid(x):
    # logistic via tanh: exact identity, runs on the (otherwise idle) EUP slot
    # instead of putting a VPU divide on the serial LSTM critical path.
    return 0.5 * (jnp.tanh(0.5 * x) + 1.0)


def ptrnet2_kernel(n_process, n_glimpse, city_t, hidden, offs,
                   task_ref, env_ref, p_ref, out_ref, enc_ref):
    B = task_ref.shape[0]
    T = city_t
    H = hidden
    H4 = 4 * H
    F = env_ref.shape[1]

    def pblock(name, nrows, ncols=None):
        # All offsets are multiples of 8 (sublane-aligned) by construction.
        off = offs[name]
        blk = p_ref[off:off + nrows, :]
        return blk if ncols is None else blk[:, 0:ncols]

    # ---- folded embeddings + hoisted LSTM input projection -----------------
    # gates_x[b,t,:] = task[b,t,:] @ (w_emb @ w_ih) + env[b,:] @ (w_env @ w_ih) + b
    task2d = task_ref[...].reshape(B * T, 2)
    gx = jnp.dot(task2d, pblock("task_ih", 2),
                 preferred_element_type=jnp.float32).reshape(B, T, H4)
    gbias = (jnp.dot(env_ref[...], pblock("env_ih", F),
                     preferred_element_type=jnp.float32)
             + pblock("b_lstm", 1))                                # (B, 4H)
    gates_x = gx + gbias[:, None, :]                               # (B, T, 4H)

    # ---- Encoder LSTM recurrence (only h @ w_hh on the serial path) --------
    w_hh = pblock("w_hh", H)                                       # (H, 4H)
    h = jnp.zeros((B, H), jnp.float32)
    c = jnp.zeros((B, H), jnp.float32)
    for t in range(T):                       # T is small & static: unrolled
        gates = gates_x[:, t, :] + jnp.dot(h, w_hh,
                                           preferred_element_type=jnp.float32)
        i_g = _sigmoid(gates[:, 0:H])
        f_g = _sigmoid(gates[:, H:2 * H])
        g_g = jnp.tanh(gates[:, 2 * H:3 * H])
        o_g = _sigmoid(gates[:, 3 * H:4 * H])
        c = f_g * c + i_g * g_g
        h = o_g * jnp.tanh(c)
        enc_ref[:, t, :] = h                 # write straight into VMEM scratch
    query = h                                # (B, H) == h[-1]

    # ---- u2 = Conv1d(W_ref)(enc_h)  (kernel size 1 => one batched matmul) --
    enc2d = enc_ref[...].reshape(B * T, H)
    u2 = (jnp.dot(enc2d, pblock("w_ref", H, H),
                  preferred_element_type=jnp.float32)
          + pblock("b_ref", 1, H)).reshape(B, T, H)                # (B, T, H)

    w_q = pblock("w_q", H, H)
    b_q = pblock("b_q", 1, H)
    vec3 = pblock("vec", 1, H).reshape(1, 1, H)                    # V

    # ---- glimpse loop -------------------------------------------------------
    for _ in range(n_process):
        for _ in range(n_glimpse):
            q1 = jnp.dot(query, w_q,
                         preferred_element_type=jnp.float32) + b_q # (B, H)
            t_arg = jnp.tanh(u2 + q1[:, None, :])                  # (B, T, H)
            u = jnp.sum(t_arg * vec3, axis=-1)                     # (B, T)
            u_max = jnp.max(u, axis=1, keepdims=True)
            e = jnp.exp(u - u_max)
            a = e / jnp.sum(e, axis=1, keepdims=True)              # softmax over T
            query = jnp.sum(u2 * a[:, :, None], axis=1)            # (B, H)

    # ---- final2FC: Linear(H,H,no bias) -> ReLU -> Linear(H,1,no bias) ------
    h1 = jnp.maximum(
        jnp.dot(query, pblock("fc1", H, H),
                preferred_element_type=jnp.float32), 0.0)
    # fc2 stored as a row (1,H): VPU mul + lane reduce, no 1-lane-wide matmul.
    out_ref[...] = jnp.sum(h1 * pblock("fc2", 1, H), axis=-1, keepdims=True)


# --------------------- host-side parameter packing -------------------------
def pack_params(params, hidden):
    """Fold embeddings into the LSTM input projection and pack every parameter
    into a single (rows, 4H) f32 array with 8-row-aligned sections."""
    H = hidden
    H4 = 4 * H
    hp = jax.lax.Precision.HIGHEST
    # valid because Embedding / Env_Embedding are bias-free linears
    w_task_ih = jnp.dot(params["w_emb_T"], params["w_ih_T"], precision=hp)  # (2, 4H)
    w_env_ih = jnp.dot(params["w_env_T"], params["w_ih_T"], precision=hp)   # (F, 4H)

    sections = [
        ("task_ih", w_task_ih),
        ("env_ih", w_env_ih),
        ("b_lstm", params["b_lstm"]),
        ("w_hh", params["w_hh_T"]),
        ("w_q", params["w_q_T"]),
        ("b_q", params["b_q"]),
        ("w_ref", params["w_ref_T"]),
        ("b_ref", params["b_ref"]),
        ("vec", params["vec"]),
        ("fc1", params["fc1_T"]),
        ("fc2", params["fc2_T"].T),      # (H,1) stored as a row (1,H)
    ]
    blocks, offs, row = [], {}, 0
    for name, a in sections:
        a = jnp.asarray(a, jnp.float32)
        r, c = a.shape
        rows = -(-r // 8) * 8            # pad each section to a sublane multiple
        blocks.append(jnp.pad(a, ((0, rows - r), (0, H4 - c))))
        offs[name] = row
        row += rows
    packed = jnp.concatenate(blocks, axis=0)    # (rows, 4H) ~ 94 KiB at H=32
    return packed, offs


def ptrnet2_forward(task_data, env_data, params, *,
                    n_process=N_PROCESS, n_glimpse=N_GLIMPSE):
    batch, city_t, _ = task_data.shape
    hidden = params["w_q_T"].shape[0]
    packed, offs = pack_params(params, hidden)
    kernel = functools.partial(ptrnet2_kernel, n_process, n_glimpse,
                               city_t, hidden, offs)
    out = pl.pallas_call(
        kernel,
        out_shape=jax.ShapeDtypeStruct((batch, 1), jnp.float32),
        in_specs=[pl.BlockSpec(memory_space=pltpu.MemorySpace.VMEM)] * 3,
        out_specs=pl.BlockSpec(memory_space=pltpu.MemorySpace.VMEM),
        scratch_shapes=[pltpu.VMEM((batch, city_t, hidden), jnp.float32)],
    )(task_data, env_data, packed)
    return out[:, 0]                                               # pred_l: (batch,)


# --------------------- deterministic parameter init -----------------------
def init_params(key, embed=EMBED, hidden=HIDDEN, slots=SLOTS,
                init_min=INIT_MIN, init_max=INIT_MAX):
    def u(k, shape):
        return jax.random.uniform(k, shape, jnp.float32, init_min, init_max)

    ks = jax.random.split(key, 13)
    H, E, F = hidden, embed, slots * 2
    params = {
        # nn.Linear(2, embed, bias=False).weight : (E, 2) -> stored (2, E)
        "w_emb_T": u(ks[0], (2, E)),
        # nn.Linear(slots*2, embed, bias=False).weight : (E, F) -> (F, E)
        "w_env_T": u(ks[1], (F, E)),
        # LSTM weight_ih_l0 (4H, E) -> (E, 4H); weight_hh_l0 (4H, H) -> (H, 4H)
        "w_ih_T": u(ks[2], (E, 4 * H)),
        "w_hh_T": u(ks[3], (H, 4 * H)),
        # bias_ih_l0 + bias_hh_l0, folded together : (1, 4H)
        "b_lstm": u(ks[4], (1, 4 * H)) + u(ks[5], (1, 4 * H)),
        # W_q : Linear(H, H, bias=True)
        "w_q_T": u(ks[6], (H, H)),
        "b_q": u(ks[7], (1, H)),
        # W_ref : Conv1d(H, H, 1) -> weight (H, H, 1) treated as (H, H) -> (in, out)
        "w_ref_T": u(ks[8], (H, H)),
        "b_ref": u(ks[9], (1, H)),
        # Vec : (embed,) -> (1, E)
        "vec": u(ks[10], (1, E)),
        # final2FC: Linear(H, H, no bias), Linear(H, 1, no bias)
        "fc1_T": u(ks[11], (H, H)),
        "fc2_T": u(ks[12], (H, 1)),
    }
    return params


# ------------------------ pure-JAX reference check -------------------------
# Implements the original (unfolded) module algebra at HIGHEST precision, so it
# also validates that the host-side weight folding is semantics-preserving.
def ptrnet2_reference(task_data, env_data, p, *,
                      n_process=N_PROCESS, n_glimpse=N_GLIMPSE):
    hp = jax.lax.Precision.HIGHEST
    B, T, _ = task_data.shape
    H = p["w_q_T"].shape[0]
    emb = jnp.einsum("btk,ke->bte", task_data, p["w_emb_T"], precision=hp)
    env_emb = jnp.dot(env_data, p["w_env_T"], precision=hp)
    x = emb + env_emb[:, None, :]
    h = jnp.zeros((B, H), jnp.float32)
    c = jnp.zeros((B, H), jnp.float32)
    hs = []
    for t in range(T):
        g = (jnp.dot(x[:, t, :], p["w_ih_T"], precision=hp)
             + jnp.dot(h, p["w_hh_T"], precision=hp) + p["b_lstm"])
        i_g = jax.nn.sigmoid(g[:, :H]); f_g = jax.nn.sigmoid(g[:, H:2 * H])
        g_g = jnp.tanh(g[:, 2 * H:3 * H]); o_g = jax.nn.sigmoid(g[:, 3 * H:])
        c = f_g * c + i_g * g_g
        h = o_g * jnp.tanh(c)
        hs.append(h)
    enc_h = jnp.stack(hs, axis=1)
    query = h
    u2 = jnp.einsum("bth,ho->bto", enc_h, p["w_ref_T"], precision=hp) + p["b_ref"]
    for _ in range(n_process * n_glimpse):
        q1 = jnp.dot(query, p["w_q_T"], precision=hp) + p["b_q"]
        t_arg = jnp.tanh(u2 + q1[:, None, :])
        u = jnp.sum(t_arg * p["vec"][0][None, None, :], axis=-1)
        a = jax.nn.softmax(u, axis=1)
        query = jnp.sum(u2 * a[:, :, None], axis=1)
    h1 = jax.nn.relu(jnp.dot(query, p["fc1_T"], precision=hp))
    return jnp.dot(h1, p["fc2_T"], precision=hp)[:, 0]


if __name__ == "__main__":
    key = jax.random.PRNGKey(0)
    k_task, k_env, k_params = jax.random.split(key, 3)

    task_data = jax.random.normal(k_task, (BATCH, CITY_T, 2), jnp.float32)
    env_data = jax.random.normal(k_env, (BATCH, SLOTS * 2), jnp.float32)
    params = init_params(k_params)

    pred = ptrnet2_forward(task_data, env_data, params)
    pred = jax.block_until_ready(pred)

    ref = ptrnet2_reference(task_data, env_data, params)
    assert pred.shape == (BATCH,)
    assert bool(jnp.allclose(pred, ref, rtol=5e-3, atol=5e-4)), (pred, ref)

    print("KERNEL_OK")
</pallas_src>

<mosaic_0001>
module attributes {stable_mosaic.version = 11 : i64} {
  func.func @ptrnet2_kernel(%arg0: memref<2x8x2xf32, #tpu.memory_space<vmem>>, %arg1: memref<2x6xf32, #tpu.memory_space<vmem>>, %arg2: memref<184x128xf32, #tpu.memory_space<vmem>>, %arg3: memref<2x1xf32, #tpu.memory_space<vmem>>, %arg4: memref<2x8x32xf32, #tpu.memory_space<vmem>>) attributes {dimension_semantics = [], scalar_prefetch = 0 : i64, scratch_operands = 1 : i64, tpu.core_type = #tpu.core_type<tc>} {
    %c0 = arith.constant 0 : index
    %c0_0 = arith.constant 0 : index
    %c0_1 = arith.constant 0 : index
    %0 = vector.load %arg0[%c0, %c0_0, %c0_1] : memref<2x8x2xf32, #tpu.memory_space<vmem>>, vector<2x8x2xf32>
    %1 = vector.shape_cast %0 : vector<2x8x2xf32> to vector<16x2xf32>
    %c0_2 = arith.constant 0 : index
    %c0_3 = arith.constant 0 : index
    %2 = vector.load %arg2[%c0_2, %c0_3] : memref<184x128xf32, #tpu.memory_space<vmem>>, vector<2x128xf32>
    %cst = arith.constant dense<0.000000e+00> : vector<16x128xf32>
    %3 = tpu.matmul %1, %2, %cst {dimension_numbers = #tpu.dot_dimension_numbers<[1], [0], [0], [1], [0, 0, 1, 1], [], []>} : vector<16x2xf32>, vector<2x128xf32>, vector<16x128xf32> -> vector<16x128xf32>
    %4 = vector.shape_cast %3 : vector<16x128xf32> to vector<2x8x128xf32>
    %c0_4 = arith.constant 0 : index
    %c0_5 = arith.constant 0 : index
    %5 = vector.load %arg1[%c0_4, %c0_5] : memref<2x6xf32, #tpu.memory_space<vmem>>, vector<2x6xf32>
    %c8 = arith.constant 8 : index
    %c0_6 = arith.constant 0 : index
    %6 = vector.load %arg2[%c8, %c0_6] : memref<184x128xf32, #tpu.memory_space<vmem>>, vector<6x128xf32>
    %cst_7 = arith.constant dense<0.000000e+00> : vector<2x128xf32>
    %7 = tpu.matmul %5, %6, %cst_7 {dimension_numbers = #tpu.dot_dimension_numbers<[1], [0], [0], [1], [0, 0, 1, 1], [], []>} : vector<2x6xf32>, vector<6x128xf32>, vector<2x128xf32> -> vector<2x128xf32>
    %c16 = arith.constant 16 : index
    %c0_8 = arith.constant 0 : index
    %8 = vector.load %arg2[%c16, %c0_8] : memref<184x128xf32, #tpu.memory_space<vmem>>, vector<1x128xf32>
    %9 = vector.broadcast %8 : vector<1x128xf32> to vector<2x128xf32>
    %10 = arith.addf %7, %9 : vector<2x128xf32>
    %11 = vector.shape_cast %10 : vector<2x128xf32> to vector<2x1x128xf32>
    %12 = vector.broadcast %11 : vector<2x1x128xf32> to vector<2x8x128xf32>
    %13 = arith.addf %4, %12 : vector<2x8x128xf32>
    %c24 = arith.constant 24 : index
    %c0_9 = arith.constant 0 : index
    %14 = vector.load %arg2[%c24, %c0_9] : memref<184x128xf32, #tpu.memory_space<vmem>>, vector<32x128xf32>
    %cst_10 = arith.constant 0.000000e+00 : f32
    %15 = vector.broadcast %cst_10 : f32 to vector<2x32xf32>
    %cst_11 = arith.constant 0.000000e+00 : f32
    %16 = vector.broadcast %cst_11 : f32 to vector<2x32xf32>
    %17 = vector.extract_strided_slice %13 {offsets = [0, 0, 0], sizes = [2, 1, 128], strides = [1, 1, 1]} : vector<2x8x128xf32> to vector<2x1x128xf32>
    %18 = vector.shape_cast %17 : vector<2x1x128xf32> to vector<2x128xf32>
    %cst_12 = arith.constant dense<0.000000e+00> : vector<2x128xf32>
    %19 = tpu.matmul %15, %14, %cst_12 {dimension_numbers = #tpu.dot_dimension_numbers<[1], [0], [0], [1], [0, 0, 1, 1], [], []>} : vector<2x32xf32>, vector<32x128xf32>, vector<2x128xf32> -> vector<2x128xf32>
    %20 = arith.addf %18, %19 : vector<2x128xf32>
    %21 = vector.extract_strided_slice %20 {offsets = [0, 0], sizes = [2, 32], strides = [1, 1]} : vector<2x128xf32> to vector<2x32xf32>
    %cst_13 = arith.constant 5.000000e-01 : f32
    %22 = vector.broadcast %cst_13 : f32 to vector<2x32xf32>
    %23 = arith.mulf %22, %21 : vector<2x32xf32>
    %24 = math.tanh %23 : vector<2x32xf32>
    %cst_14 = arith.constant 1.000000e+00 : f32
    %25 = vector.broadcast %cst_14 : f32 to vector<2x32xf32>
    %26 = arith.addf %24, %25 : vector<2x32xf32>
    %cst_15 = arith.constant 5.000000e-01 : f32
    %27 = vector.broadcast %cst_15 : f32 to vector<2x32xf32>
    %28 = arith.mulf %27, %26 : vector<2x32xf32>
    %29 = vector.extract_strided_slice %20 {offsets = [0, 32], sizes = [2, 32], strides = [1, 1]} : vector<2x128xf32> to vector<2x32xf32>
    %cst_16 = arith.constant 5.000000e-01 : f32
    %30 = vector.broadcast %cst_16 : f32 to vector<2x32xf32>
    %31 = arith.mulf %30, %29 : vector<2x32xf32>
    %32 = math.tanh %31 : vector<2x32xf32>
    %cst_17 = arith.constant 1.000000e+00 : f32
    %33 = vector.broadcast %cst_17 : f32 to vector<2x32xf32>
    %34 = arith.addf %32, %33 : vector<2x32xf32>
    %cst_18 = arith.constant 5.000000e-01 : f32
    %35 = vector.broadcast %cst_18 : f32 to vector<2x32xf32>
    %36 = arith.mulf %35, %34 : vector<2x32xf32>
    %37 = vector.extract_strided_slice %20 {offsets = [0, 64], sizes = [2, 32], strides = [1, 1]} : vector<2x128xf32> to vector<2x32xf32>
    %38 = math.tanh %37 : vector<2x32xf32>
    %39 = vector.extract_strided_slice %20 {offsets = [0, 96], sizes = [2, 32], strides = [1, 1]} : vector<2x128xf32> to vector<2x32xf32>
    %cst_19 = arith.constant 5.000000e-01 : f32
    %40 = vector.broadcast %cst_19 : f32 to vector<2x32xf32>
    %41 = arith.mulf %40, %39 : vector<2x32xf32>
    %42 = math.tanh %41 : vector<2x32xf32>
    %cst_20 = arith.constant 1.000000e+00 : f32
    %43 = vector.broadcast %cst_20 : f32 to vector<2x32xf32>
    %44 = arith.addf %42, %43 : vector<2x32xf32>
    %cst_21 = arith.constant 5.000000e-01 : f32
    %45 = vector.broadcast %cst_21 : f32 to vector<2x32xf32>
    %46 = arith.mulf %45, %44 : vector<2x32xf32>
    %47 = arith.mulf %36, %16 : vector<2x32xf32>
    %48 = arith.mulf %28, %38 : vector<2x32xf32>
    %49 = arith.addf %47, %48 : vector<2x32xf32>
    %50 = math.tanh %49 : vector<2x32xf32>
    %51 = arith.mulf %46, %50 : vector<2x32xf32>
    %c0_22 = arith.constant 0 : index
    %c0_23 = arith.constant 0 : index
    %c0_24 = arith.constant 0 : index
    %52 = vector.load %arg4[%c0_22, %c0_23, %c0_24] : memref<2x8x32xf32, #tpu.memory_space<vmem>>, vector<2x1x32xf32>
    %53 = vector.shape_cast %52 : vector<2x1x32xf32> to vector<2x32xf32>
    %54 = vector.shape_cast %51 : vector<2x32xf32> to vector<2x1x32xf32>
    tpu.vector_store %arg4[%c0_22, %c0_23, %c0_24], %54 {strides = array<i32>} : memref<2x8x32xf32, #tpu.memory_space<vmem>>, vector<2x1x32xf32>,
    %55 = vector.extract_strided_slice %13 {offsets = [0, 1, 0], sizes = [2, 1, 128], strides = [1, 1, 1]} : vector<2x8x128xf32> to vector<2x1x128xf32>
    %56 = vector.shape_cast %55 : vector<2x1x128xf32> to vector<2x128xf32>
    %cst_25 = arith.constant dense<0.000000e+00> : vector<2x128xf32>
    %57 = tpu.matmul %51, %14, %cst_25 {dimension_numbers = #tpu.dot_dimension_numbers<[1], [0], [0], [1], [0, 0, 1, 1], [], []>} : vector<2x32xf32>, vector<32x128xf32>, vector<2x128xf32> -> vector<2x128xf32>
    %58 = arith.addf %56, %57 : vector<2x128xf32>
    %59 = vector.extract_strided_slice %58 {offsets = [0, 0], sizes = [2, 32], strides = [1, 1]} : vector<2x128xf32> to vector<2x32xf32>
    %cst_26 = arith.constant 5.000000e-01 : f32
    %60 = vector.broadcast %cst_26 : f32 to vector<2x32xf32>
    %61 = arith.mulf %60, %59 : vector<2x32xf32>
    %62 = math.tanh %61 : vector<2x32xf32>
    %cst_27 = arith.constant 1.000000e+00 : f32
    %63 = vector.broadcast %cst_27 : f32 to vector<2x32xf32>
    %64 = arith.addf %62, %63 : vector<2x32xf32>
    %cst_28 = arith.constant 5.000000e-01 : f32
    %65 = vector.broadcast %cst_28 : f32 to vector<2x32xf32>
    %66 = arith.mulf %65, %64 : vector<2x32xf32>
    %67 = vector.extract_strided_slice %58 {offsets = [0, 32], sizes = [2, 32], strides = [1, 1]} : vector<2x128xf32> to vector<2x32xf32>
    %cst_29 = arith.constant 5.000000e-01 : f32
    %68 = vector.broadcast %cst_29 : f32 to vector<2x32xf32>
    %69 = arith.mulf %68, %67 : vector<2x32xf32>
    %70 = math.tanh %69 : vector<2x32xf32>
    %cst_30 = arith.constant 1.000000e+00 : f32
    %71 = vector.broadcast %cst_30 : f32 to vector<2x32xf32>
    %72 = arith.addf %70, %71 : vector<2x32xf32>
    %cst_31 = arith.constant 5.000000e-01 : f32
    %73 = vector.broadcast %cst_31 : f32 to vector<2x32xf32>
    %74 = arith.mulf %73, %72 : vector<2x32xf32>
    %75 = vector.extract_strided_slice %58 {offsets = [0, 64], sizes = [2, 32], strides = [1, 1]} : vector<2x128xf32> to vector<2x32xf32>
    %76 = math.tanh %75 : vector<2x32xf32>
    %77 = vector.extract_strided_slice %58 {offsets = [0, 96], sizes = [2, 32], strides = [1, 1]} : vector<2x128xf32> to vector<2x32xf32>
    %cst_32 = arith.constant 5.000000e-01 : f32
    %78 = vector.broadcast %cst_32 : f32 to vector<2x32xf32>
    %79 = arith.mulf %78, %77 : vector<2x32xf32>
    %80 = math.tanh %79 : vector<2x32xf32>
    %cst_33 = arith.constant 1.000000e+00 : f32
    %81 = vector.broadcast %cst_33 : f32 to vector<2x32xf32>
    %82 = arith.addf %80, %81 : vector<2x32xf32>
    %cst_34 = arith.constant 5.000000e-01 : f32
    %83 = vector.broadcast %cst_34 : f32 to vector<2x32xf32>
    %84 = arith.mulf %83, %82 : vector<2x32xf32>
    %85 = arith.mulf %74, %49 : vector<2x32xf32>
    %86 = arith.mulf %66, %76 : vector<2x32xf32>
    %87 = arith.addf %85, %86 : vector<2x32xf32>
    %88 = math.tanh %87 : vector<2x32xf32>
    %89 = arith.mulf %84, %88 : vector<2x32xf32>
    %c0_35 = arith.constant 0 : index
    %c1 = arith.constant 1 : index
    %c0_36 = arith.constant 0 : index
    %90 = vector.load %arg4[%c0_35, %c1, %c0_36] : memref<2x8x32xf32, #tpu.memory_space<vmem>>, vector<2x1x32xf32>
    %91 = vector.shape_cast %90 : vector<2x1x32xf32> to vector<2x32xf32>
    %92 = vector.shape_cast %89 : vector<2x32xf32> to vector<2x1x32xf32>
    tpu.vector_store %arg4[%c0_35, %c1, %c0_36], %92 {strides = array<i32>} : memref<2x8x32xf32, #tpu.memory_space<vmem>>, vector<2x1x32xf32>,
    %93 = vector.extract_strided_slice %13 {offsets = [0, 2, 0], sizes = [2, 1, 128], strides = [1, 1, 1]} : vector<2x8x128xf32> to vector<2x1x128xf32>
    %94 = vector.shape_cast %93 : vector<2x1x128xf32> to vector<2x128xf32>
    %cst_37 = arith.constant dense<0.000000e+00> : vector<2x128xf32>
    %95 = tpu.matmul %89, %14, %cst_37 {dimension_numbers = #tpu.dot_dimension_numbers<[1], [0], [0], [1], [0, 0, 1, 1], [], []>} : vector<2x32xf32>, vector<32x128xf32>, vector<2x128xf32> -> vector<2x128xf32>
    %96 = arith.addf %94, %95 : vector<2x128xf32>
    %97 = vector.extract_strided_slice %96 {offsets = [0, 0], sizes = [2, 32], strides = [1, 1]} : vector<2x128xf32> to vector<2x32xf32>
    %cst_38 = arith.constant 5.000000e-01 : f32
    %98 = vector.broadcast %cst_38 : f32 to vector<2x32xf32>
    %99 = arith.mulf %98, %97 : vector<2x32xf32>
    %100 = math.tanh %99 : vector<2x32xf32>
    %cst_39 = arith.constant 1.000000e+00 : f32
    %101 = vector.broadcast %cst_39 : f32 to vector<2x32xf32>
    %102 = arith.addf %100, %101 : vector<2x32xf32>
    %cst_40 = arith.constant 5.000000e-01 : f32
    %103 = vector.broadcast %cst_40 : f32 to vector<2x32xf32>
    %104 = arith.mulf %103, %102 : vector<2x32xf32>
    %105 = vector.extract_strided_slice %96 {offsets = [0, 32], sizes = [2, 32], strides = [1, 1]} : vector<2x128xf32> to vector<2x32xf32>
    %cst_41 = arith.constant 5.000000e-01 : f32
    %106 = vector.broadcast %cst_41 : f32 to vector<2x32xf32>
    %107 = arith.mulf %106, %105 : vector<2x32xf32>
    %108 = math.tanh %107 : vector<2x32xf32>
    %cst_42 = arith.constant 1.000000e+00 : f32
    %109 = vector.broadcast %cst_42 : f32 to vector<2x32xf32>
    %110 = arith.addf %108, %109 : vector<2x32xf32>
    %cst_43 = arith.constant 5.000000e-01 : f32
    %111 = vector.broadcast %cst_43 : f32 to vector<2x32xf32>
    %112 = arith.mulf %111, %110 : vector<2x32xf32>
    %113 = vector.extract_strided_slice %96 {offsets = [0, 64], sizes = [2, 32], strides = [1, 1]} : vector<2x128xf32> to vector<2x32xf32>
    %114 = math.tanh %113 : vector<2x32xf32>
    %115 = vector.extract_strided_slice %96 {offsets = [0, 96], sizes = [2, 32], strides = [1, 1]} : vector<2x128xf32> to vector<2x32xf32>
    %cst_44 = arith.constant 5.000000e-01 : f32
    %116 = vector.broadcast %cst_44 : f32 to vector<2x32xf32>
    %117 = arith.mulf %116, %115 : vector<2x32xf32>
    %118 = math.tanh %117 : vector<2x32xf32>
    %cst_45 = arith.constant 1.000000e+00 : f32
    %119 = vector.broadcast %cst_45 : f32 to vector<2x32xf32>
    %120 = arith.addf %118, %119 : vector<2x32xf32>
    %cst_46 = arith.constant 5.000000e-01 : f32
    %121 = vector.broadcast %cst_46 : f32 to vector<2x32xf32>
    %122 = arith.mulf %121, %120 : vector<2x32xf32>
    %123 = arith.mulf %112, %87 : vector<2x32xf32>
    %124 = arith.mulf %104, %114 : vector<2x32xf32>
    %125 = arith.addf %123, %124 : vector<2x32xf32>
    %126 = math.tanh %125 : vector<2x32xf32>
    %127 = arith.mulf %122, %126 : vector<2x32xf32>
    %c0_47 = arith.constant 0 : index
    %c2 = arith.constant 2 : index
    %c0_48 = arith.constant 0 : index
    %128 = vector.load %arg4[%c0_47, %c2, %c0_48] : memref<2x8x32xf32, #tpu.memory_space<vmem>>, vector<2x1x32xf32>
    %129 = vector.shape_cast %128 : vector<2x1x32xf32> to vector<2x32xf32>
    %130 = vector.shape_cast %127 : vector<2x32xf32> to vector<2x1x32xf32>
    tpu.vector_store %arg4[%c0_47, %c2, %c0_48], %130 {strides = array<i32>} : memref<2x8x32xf32, #tpu.memory_space<vmem>>, vector<2x1x32xf32>,
    %131 = vector.extract_strided_slice %13 {offsets = [0, 3, 0], sizes = [2, 1, 128], strides = [1, 1, 1]} : vector<2x8x128xf32> to vector<2x1x128xf32>
    %132 = vector.shape_cast %131 : vector<2x1x128xf32> to vector<2x128xf32>
    %cst_49 = arith.constant dense<0.000000e+00> : vector<2x128xf32>
    %133 = tpu.matmul %127, %14, %cst_49 {dimension_numbers = #tpu.dot_dimension_numbers<[1], [0], [0], [1], [0, 0, 1, 1], [], []>} : vector<2x32xf32>, vector<32x128xf32>, vector<2x128xf32> -> vector<2x128xf32>
    %134 = arith.addf %132, %133 : vector<2x128xf32>
    %135 = vector.extract_strided_slice %134 {offsets = [0, 0], sizes = [2, 32], strides = [1, 1]} : vector<2x128xf32> to vector<2x32xf32>
    %cst_50 = arith.constant 5.000000e-01 : f32
    %136 = vector.broadcast %cst_50 : f32 to vector<2x32xf32>
    %137 = arith.mulf %136, %135 : vector<2x32xf32>
    %138 = math.tanh %137 : vector<2x32xf32>
    %cst_51 = arith.constant 1.000000e+00 : f32
    %139 = vector.broadcast %cst_51 : f32 to vector<2x32xf32>
    %140 = arith.addf %138, %139 : vector<2x32xf32>
    %cst_52 = arith.constant 5.000000e-01 : f32
    %141 = vector.broadcast %cst_52 : f32 to vector<2x32xf32>
    %142 = arith.mulf %141, %140 : vector<2x32xf32>
    %143 = vector.extract_strided_slice %134 {offsets = [0, 32], sizes = [2, 32], strides = [1, 1]} : vector<2x128xf32> to vector<2x32xf32>
    %cst_53 = arith.constant 5.000000e-01 : f32
    %144 = vector.broadcast %cst_53 : f32 to vector<2x32xf32>
    %145 = arith.mulf %144, %143 : vector<2x32xf32>
    %146 = math.tanh %145 : vector<2x32xf32>
    %cst_54 = arith.constant 1.000000e+00 : f32
    %147 = vector.broadcast %cst_54 : f32 to vector<2x32xf32>
    %148 = arith.addf %146, %147 : vector<2x32xf32>
    %cst_55 = arith.constant 5.000000e-01 : f32
    %149 = vector.broadcast %cst_55 : f32 to vector<2x32xf32>
    %150 = arith.mulf %149, %148 : vector<2x32xf32>
    %151 = vector.extract_strided_slice %134 {offsets = [0, 64], sizes = [2, 32], strides = [1, 1]} : vector<2x128xf32> to vector<2x32xf32>
    %152 = math.tanh %151 : vector<2x32xf32>
    %153 = vector.extract_strided_slice %134 {offsets = [0, 96], sizes = [2, 32], strides = [1, 1]} : vector<2x128xf32> to vector<2x32xf32>
    %cst_56 = arith.constant 5.000000e-01 : f32
    %154 = vector.broadcast %cst_56 : f32 to vector<2x32xf32>
    %155 = arith.mulf %154, %153 : vector<2x32xf32>
    %156 = math.tanh %155 : vector<2x32xf32>
    %cst_57 = arith.constant 1.000000e+00 : f32
    %157 = vector.broadcast %cst_57 : f32 to vector<2x32xf32>
    %158 = arith.addf %156, %157 : vector<2x32xf32>
    %cst_58 = arith.constant 5.000000e-01 : f32
    %159 = vector.broadcast %cst_58 : f32 to vector<2x32xf32>
    %160 = arith.mulf %159, %158 : vector<2x32xf32>
    %161 = arith.mulf %150, %125 : vector<2x32xf32>
    %162 = arith.mulf %142, %152 : vector<2x32xf32>
    %163 = arith.addf %161, %162 : vector<2x32xf32>
    %164 = math.tanh %163 : vector<2x32xf32>
    %165 = arith.mulf %160, %164 : vector<2x32xf32>
    %c0_59 = arith.constant 0 : index
    %c3 = arith.constant 3 : index
    %c0_60 = arith.constant 0 : index
    %166 = vector.load %arg4[%c0_59, %c3, %c0_60] : memref<2x8x32xf32, #tpu.memory_space<vmem>>, vector<2x1x32xf32>
    %167 = vector.shape_cast %166 : vector<2x1x32xf32> to vector<2x32xf32>
    %168 = vector.shape_cast %165 : vector<2x32xf32> to vector<2x1x32xf32>
    tpu.vector_store %arg4[%c0_59, %c3, %c0_60], %168 {strides = array<i32>} : memref<2x8x32xf32, #tpu.memory_space<vmem>>, vector<2x1x32xf32>,
    %169 = vector.extract_strided_slice %13 {offsets = [0, 4, 0], sizes = [2, 1, 128], strides = [1, 1, 1]} : vector<2x8x128xf32> to vector<2x1x128xf32>
    %170 = vector.shape_cast %169 : vector<2x1x128xf32> to vector<2x128xf32>
    %cst_61 = arith.constant dense<0.000000e+00> : vector<2x128xf32>
    %171 = tpu.matmul %165, %14, %cst_61 {dimension_numbers = #tpu.dot_dimension_numbers<[1], [0], [0], [1], [0, 0, 1, 1], [], []>} : vector<2x32xf32>, vector<32x128xf32>, vector<2x128xf32> -> vector<2x128xf32>
    %172 = arith.addf %170, %171 : vector<2x128xf32>
    %173 = vector.extract_strided_slice %172 {offsets = [0, 0], sizes = [2, 32], strides = [1, 1]} : vector<2x128xf32> to vector<2x32xf32>
    %cst_62 = arith.constant 5.000000e-01 : f32
    %174 = vector.broadcast %cst_62 : f32 to vector<2x32xf32>
    %175 = arith.mulf %174, %173 : vector<2x32xf32>
    %176 = math.tanh %175 : vector<2x32xf32>
    %cst_63 = arith.constant 1.000000e+00 : f32
    %177 = vector.broadcast %cst_63 : f32 to vector<2x32xf32>
    %178 = arith.addf %176, %177 : vector<2x32xf32>
    %cst_64 = arith.constant 5.000000e-01 : f32
    %179 = vector.broadcast %cst_64 : f32 to vector<2x32xf32>
    %180 = arith.mulf %179, %178 : vector<2x32xf32>
    %181 = vector.extract_strided_slice %172 {offsets = [0, 32], sizes = [2, 32], strides = [1, 1]} : vector<2x128xf32> to vector<2x32xf32>
    %cst_65 = arith.constant 5.000000e-01 : f32
    %182 = vector.broadcast %cst_65 : f32 to vector<2x32xf32>
    %183 = arith.mulf %182, %181 : vector<2x32xf32>
    %184 = math.tanh %183 : vector<2x32xf32>
    %cst_66 = arith.constant 1.000000e+00 : f32
    %185 = vector.broadcast %cst_66 : f32 to vector<2x32xf32>
    %186 = arith.addf %184, %185 : vector<2x32xf32>
    %cst_67 = arith.constant 5.000000e-01 : f32
    %187 = vector.broadcast %cst_67 : f32 to vector<2x32xf32>
    %188 = arith.mulf %187, %186 : vector<2x32xf32>
    %189 = vector.extract_strided_slice %172 {offsets = [0, 64], sizes = [2, 32], strides = [1, 1]} : vector<2x128xf32> to vector<2x32xf32>
    %190 = math.tanh %189 : vector<2x32xf32>
    %191 = vector.extract_strided_slice %172 {offsets = [0, 96], sizes = [2, 32], strides = [1, 1]} : vector<2x128xf32> to vector<2x32xf32>
    %cst_68 = arith.constant 5.000000e-01 : f32
    %192 = vector.broadcast %cst_68 : f32 to vector<2x32xf32>
    %193 = arith.mulf %192, %191 : vector<2x32xf32>
    %194 = math.tanh %193 : vector<2x32xf32>
    %cst_69 = arith.constant 1.000000e+00 : f32
    %195 = vector.broadcast %cst_69 : f32 to vector<2x32xf32>
    %196 = arith.addf %194, %195 : vector<2x32xf32>
    %cst_70 = arith.constant 5.000000e-01 : f32
    %197 = vector.broadcast %cst_70 : f32 to vector<2x32xf32>
    %198 = arith.mulf %197, %196 : vector<2x32xf32>
    %199 = arith.mulf %188, %163 : vector<2x32xf32>
    %200 = arith.mulf %180, %190 : vector<2x32xf32>
    %201 = arith.addf %199, %200 : vector<2x32xf32>
    %202 = math.tanh %201 : vector<2x32xf32>
    %203 = arith.mulf %198, %202 : vector<2x32xf32>
    %c0_71 = arith.constant 0 : index
    %c4 = arith.constant 4 : index
    %c0_72 = arith.constant 0 : index
    %204 = vector.load %arg4[%c0_71, %c4, %c0_72] : memref<2x8x32xf32, #tpu.memory_space<vmem>>, vector<2x1x32xf32>
    %205 = vector.shape_cast %204 : vector<2x1x32xf32> to vector<2x32xf32>
    %206 = vector.shape_cast %203 : vector<2x32xf32> to vector<2x1x32xf32>
    tpu.vector_store %arg4[%c0_71, %c4, %c0_72], %206 {strides = array<i32>} : memref<2x8x32xf32, #tpu.memory_space<vmem>>, vector<2x1x32xf32>,
    %207 = vector.extract_strided_slice %13 {offsets = [0, 5, 0], sizes = [2, 1, 128], strides = [1, 1, 1]} : vector<2x8x128xf32> to vector<2x1x128xf32>
    %208 = vector.shape_cast %207 : vector<2x1x128xf32> to vector<2x128xf32>
    %cst_73 = arith.constant dense<0.000000e+00> : vector<2x128xf32>
    %209 = tpu.matmul %203, %14, %cst_73 {dimension_numbers = #tpu.dot_dimension_numbers<[1], [0], [0], [1], [0, 0, 1, 1], [], []>} : vector<2x32xf32>, vector<32x128xf32>, vector<2x128xf32> -> vector<2x128xf32>
    %210 = arith.addf %208, %209 : vector<2x128xf32>
    %211 = vector.extract_strided_slice %210 {offsets = [0, 0], sizes = [2, 32], strides = [1, 1]} : vector<2x128xf32> to vector<2x32xf32>
    %cst_74 = arith.constant 5.000000e-01 : f32
    %212 = vector.broadcast %cst_74 : f32 to vector<2x32xf32>
    %213 = arith.mulf %212, %211 : vector<2x32xf32>
    %214 = math.tanh %213 : vector<2x32xf32>
    %cst_75 = arith.constant 1.000000e+00 : f32
    %215 = vector.broadcast %cst_75 : f32 to vector<2x32xf32>
    %216 = arith.addf %214, %215 : vector<2x32xf32>
    %cst_76 = arith.constant 5.000000e-01 : f32
    %217 = vector.broadcast %cst_76 : f32 to vector<2x32xf32>
    %218 = arith.mulf %217, %216 : vector<2x32xf32>
    %219 = vector.extract_strided_slice %210 {offsets = [0, 32], sizes = [2, 32], strides = [1, 1]} : vector<2x128xf32> to vector<2x32xf32>
    %cst_77 = arith.constant 5.000000e-01 : f32
    %220 = vector.broadcast %cst_77 : f32 to vector<2x32xf32>
    %221 = arith.mulf %220, %219 : vector<2x32xf32>
    %222 = math.tanh %221 : vector<2x32xf32>
    %cst_78 = arith.constant 1.000000e+00 : f32
    %223 = vector.broadcast %cst_78 : f32 to vector<2x32xf32>
    %224 = arith.addf %222, %223 : vector<2x32xf32>
    %cst_79 = arith.constant 5.000000e-01 : f32
    %225 = vector.broadcast %cst_79 : f32 to vector<2x32xf32>
    %226 = arith.mulf %225, %224 : vector<2x32xf32>
    %227 = vector.extract_strided_slice %210 {offsets = [0, 64], sizes = [2, 32], strides = [1, 1]} : vector<2x128xf32> to vector<2x32xf32>
    %228 = math.tanh %227 : vector<2x32xf32>
    %229 = vector.extract_strided_slice %210 {offsets = [0, 96], sizes = [2, 32], strides = [1, 1]} : vector<2x128xf32> to vector<2x32xf32>
    %cst_80 = arith.constant 5.000000e-01 : f32
    %230 = vector.broadcast %cst_80 : f32 to vector<2x32xf32>
    %231 = arith.mulf %230, %229 : vector<2x32xf32>
    %232 = math.tanh %231 : vector<2x32xf32>
    %cst_81 = arith.constant 1.000000e+00 : f32
    %233 = vector.broadcast %cst_81 : f32 to vector<2x32xf32>
    %234 = arith.addf %232, %233 : vector<2x32xf32>
    %cst_82 = arith.constant 5.000000e-01 : f32
    %235 = vector.broadcast %cst_82 : f32 to vector<2x32xf32>
    %236 = arith.mulf %235, %234 : vector<2x32xf32>
    %237 = arith.mulf %226, %201 : vector<2x32xf32>
    %238 = arith.mulf %218, %228 : vector<2x32xf32>
    %239 = arith.addf %237, %238 : vector<2x32xf32>
    %240 = math.tanh %239 : vector<2x32xf32>
    %241 = arith.mulf %236, %240 : vector<2x32xf32>
    %c0_83 = arith.constant 0 : index
    %c5 = arith.constant 5 : index
    %c0_84 = arith.constant 0 : index
    %242 = vector.load %arg4[%c0_83, %c5, %c0_84] : memref<2x8x32xf32, #tpu.memory_space<vmem>>, vector<2x1x32xf32>
    %243 = vector.shape_cast %242 : vector<2x1x32xf32> to vector<2x32xf32>
    %244 = vector.shape_cast %241 : vector<2x32xf32> to vector<2x1x32xf32>
    tpu.vector_store %arg4[%c0_83, %c5, %c0_84], %244 {strides = array<i32>} : memref<2x8x32xf32, #tpu.memory_space<vmem>>, vector<2x1x32xf32>,
    %245 = vector.extract_strided_slice %13 {offsets = [0, 6, 0], sizes = [2, 1, 128], strides = [1, 1, 1]} : vector<2x8x128xf32> to vector<2x1x128xf32>
    %246 = vector.shape_cast %245 : vector<2x1x128xf32> to vector<2x128xf32>
    %cst_85 = arith.constant dense<0.000000e+00> : vector<2x128xf32>
    %247 = tpu.matmul %241, %14, %cst_85 {dimension_numbers = #tpu.dot_dimension_numbers<[1], [0], [0], [1], [0, 0, 1, 1], [], []>} : vector<2x32xf32>, vector<32x128xf32>, vector<2x128xf32> -> vector<2x128xf32>
    %248 = arith.addf %246, %247 : vector<2x128xf32>
    %249 = vector.extract_strided_slice %248 {offsets = [0, 0], sizes = [2, 32], strides = [1, 1]} : vector<2x128xf32> to vector<2x32xf32>
    %cst_86 = arith.constant 5.000000e-01 : f32
    %250 = vector.broadcast %cst_86 : f32 to vector<2x32xf32>
    %251 = arith.mulf %250, %249 : vector<2x32xf32>
    %252 = math.tanh %251 : vector<2x32xf32>
    %cst_87 = arith.constant 1.000000e+00 : f32
    %253 = vector.broadcast %cst_87 : f32 to vector<2x32xf32>
    %254 = arith.addf %252, %253 : vector<2x32xf32>
    %cst_88 = arith.constant 5.000000e-01 : f32
    %255 = vector.broadcast %cst_88 : f32 to vector<2x32xf32>
    %256 = arith.mulf %255, %254 : vector<2x32xf32>
    %257 = vector.extract_strided_slice %248 {offsets = [0, 32], sizes = [2, 32], strides = [1, 1]} : vector<2x128xf32> to vector<2x32xf32>
    %cst_89 = arith.constant 5.000000e-01 : f32
    %258 = vector.broadcast %cst_89 : f32 to vector<2x32xf32>
    %259 = arith.mulf %258, %257 : vector<2x32xf32>
    %260 = math.tanh %259 : vector<2x32xf32>
    %cst_90 = arith.constant 1.000000e+00 : f32
    %261 = vector.broadcast %cst_90 : f32 to vector<2x32xf32>
    %262 = arith.addf %260, %261 : vector<2x32xf32>
    %cst_91 = arith.constant 5.000000e-01 : f32
    %263 = vector.broadcast %cst_91 : f32 to vector<2x32xf32>
    %264 = arith.mulf %263, %262 : vector<2x32xf32>
    %265 = vector.extract_strided_slice %248 {offsets = [0, 64], sizes = [2, 32], strides = [1, 1]} : vector<2x128xf32> to vector<2x32xf32>
    %266 = math.tanh %265 : vector<2x32xf32>
    %267 = vector.extract_strided_slice %248 {offsets = [0, 96], sizes = [2, 32], strides = [1, 1]} : vector<2x128xf32> to vector<2x32xf32>
    %cst_92 = arith.constant 5.000000e-01 : f32
    %268 = vector.broadcast %cst_92 : f32 to vector<2x32xf32>
    %269 = arith.mulf %268, %267 : vector<2x32xf32>
    %270 = math.tanh %269 : vector<2x32xf32>
    %cst_93 = arith.constant 1.000000e+00 : f32
    %271 = vector.broadcast %cst_93 : f32 to vector<2x32xf32>
    %272 = arith.addf %270, %271 : vector<2x32xf32>
    %cst_94 = arith.constant 5.000000e-01 : f32
    %273 = vector.broadcast %cst_94 : f32 to vector<2x32xf32>
    %274 = arith.mulf %273, %272 : vector<2x32xf32>
    %275 = arith.mulf %264, %239 : vector<2x32xf32>
    %276 = arith.mulf %256, %266 : vector<2x32xf32>
    %277 = arith.addf %275, %276 : vector<2x32xf32>
    %278 = math.tanh %277 : vector<2x32xf32>
    %279 = arith.mulf %274, %278 : vector<2x32xf32>
    %c0_95 = arith.constant 0 : index
    %c6 = arith.constant 6 : index
    %c0_96 = arith.constant 0 : index
    %280 = vector.load %arg4[%c0_95, %c6, %c0_96] : memref<2x8x32xf32, #tpu.memory_space<vmem>>, vector<2x1x32xf32>
    %281 = vector.shape_cast %280 : vector<2x1x32xf32> to vector<2x32xf32>
    %282 = vector.shape_cast %279 : vector<2x32xf32> to vector<2x1x32xf32>
    tpu.vector_store %arg4[%c0_95, %c6, %c0_96], %282 {strides = array<i32>} : memref<2x8x32xf32, #tpu.memory_space<vmem>>, vector<2x1x32xf32>,
    %283 = vector.extract_strided_slice %13 {offsets = [0, 7, 0], sizes = [2, 1, 128], strides = [1, 1, 1]} : vector<2x8x128xf32> to vector<2x1x128xf32>
    %284 = vector.shape_cast %283 : vector<2x1x128xf32> to vector<2x128xf32>
    %cst_97 = arith.constant dense<0.000000e+00> : vector<2x128xf32>
    %285 = tpu.matmul %279, %14, %cst_97 {dimension_numbers = #tpu.dot_dimension_numbers<[1], [0], [0], [1], [0, 0, 1, 1], [], []>} : vector<2x32xf32>, vector<32x128xf32>, vector<2x128xf32> -> vector<2x128xf32>
    %286 = arith.addf %284, %285 : vector<2x128xf32>
    %287 = vector.extract_strided_slice %286 {offsets = [0, 0], sizes = [2, 32], strides = [1, 1]} : vector<2x128xf32> to vector<2x32xf32>
    %cst_98 = arith.constant 5.000000e-01 : f32
    %288 = vector.broadcast %cst_98 : f32 to vector<2x32xf32>
    %289 = arith.mulf %288, %287 : vector<2x32xf32>
    %290 = math.tanh %289 : vector<2x32xf32>
    %cst_99 = arith.constant 1.000000e+00 : f32
    %291 = vector.broadcast %cst_99 : f32 to vector<2x32xf32>
    %292 = arith.addf %290, %291 : vector<2x32xf32>
    %cst_100 = arith.constant 5.000000e-01 : f32
    %293 = vector.broadcast %cst_100 : f32 to vector<2x32xf32>
    %294 = arith.mulf %293, %292 : vector<2x32xf32>
    %295 = vector.extract_strided_slice %286 {offsets = [0, 32], sizes = [2, 32], strides = [1, 1]} : vector<2x128xf32> to vector<2x32xf32>
    %cst_101 = arith.constant 5.000000e-01 : f32
    %296 = vector.broadcast %cst_101 : f32 to vector<2x32xf32>
    %297 = arith.mulf %296, %295 : vector<2x32xf32>
    %298 = math.tanh %297 : vector<2x32xf32>
    %cst_102 = arith.constant 1.000000e+00 : f32
    %299 = vector.broadcast %cst_102 : f32 to vector<2x32xf32>
    %300 = arith.addf %298, %299 : vector<2x32xf32>
    %cst_103 = arith.constant 5.000000e-01 : f32
    %301 = vector.broadcast %cst_103 : f32 to vector<2x32xf32>
    %302 = arith.mulf %301, %300 : vector<2x32xf32>
    %303 = vector.extract_strided_slice %286 {offsets = [0, 64], sizes = [2, 32], strides = [1, 1]} : vector<2x128xf32> to vector<2x32xf32>
    %304 = math.tanh %303 : vector<2x32xf32>
    %305 = vector.extract_strided_slice %286 {offsets = [0, 96], sizes = [2, 32], strides = [1, 1]} : vector<2x128xf32> to vector<2x32xf32>
    %cst_104 = arith.constant 5.000000e-01 : f32
    %306 = vector.broadcast %cst_104 : f32 to vector<2x32xf32>
    %307 = arith.mulf %306, %305 : vector<2x32xf32>
    %308 = math.tanh %307 : vector<2x32xf32>
    %cst_105 = arith.constant 1.000000e+00 : f32
    %309 = vector.broadcast %cst_105 : f32 to vector<2x32xf32>
    %310 = arith.addf %308, %309 : vector<2x32xf32>
    %cst_106 = arith.constant 5.000000e-01 : f32
    %311 = vector.broadcast %cst_106 : f32 to vector<2x32xf32>
    %312 = arith.mulf %311, %310 : vector<2x32xf32>
    %313 = arith.mulf %302, %277 : vector<2x32xf32>
    %314 = arith.mulf %294, %304 : vector<2x32xf32>
    %315 = arith.addf %313, %314 : vector<2x32xf32>
    %316 = math.tanh %315 : vector<2x32xf32>
    %317 = arith.mulf %312, %316 : vector<2x32xf32>
    %c0_107 = arith.constant 0 : index
    %c7 = arith.constant 7 : index
    %c0_108 = arith.constant 0 : index
    %318 = vector.load %arg4[%c0_107, %c7, %c0_108] : memref<2x8x32xf32, #tpu.memory_space<vmem>>, vector<2x1x32xf32>
    %319 = vector.shape_cast %318 : vector<2x1x32xf32> to vector<2x32xf32>
    %320 = vector.shape_cast %317 : vector<2x32xf32> to vector<2x1x32xf32>
    tpu.vector_store %arg4[%c0_107, %c7, %c0_108], %320 {strides = array<i32>} : memref<2x8x32xf32, #tpu.memory_space<vmem>>, vector<2x1x32xf32>,
    %c0_109 = arith.constant 0 : index
    %c0_110 = arith.constant 0 : index
    %c0_111 = arith.constant 0 : index
    %321 = vector.load %arg4[%c0_109, %c0_110, %c0_111] : memref<2x8x32xf32, #tpu.memory_space<vmem>>, vector<2x8x32xf32>
    %322 = vector.shape_cast %321 : vector<2x8x32xf32> to vector<16x32xf32>
    %c96 = arith.constant 96 : index
    %c0_112 = arith.constant 0 : index
    %323 = vector.load %arg2[%c96, %c0_112] : memref<184x128xf32, #tpu.memory_space<vmem>>, vector<32x128xf32>
    %324 = vector.extract_strided_slice %323 {offsets = [0, 0], sizes = [32, 32], strides = [1, 1]} : vector<32x128xf32> to vector<32x32xf32>
    %cst_113 = arith.constant dense<0.000000e+00> : vector<16x32xf32>
    %325 = tpu.matmul %322, %324, %cst_113 {dimension_numbers = #tpu.dot_dimension_numbers<[1], [0], [0], [1], [0, 0, 1, 1], [], []>} : vector<16x32xf32>, vector<32x32xf32>, vector<16x32xf32> -> vector<16x32xf32>
    %c128 = arith.constant 128 : index
    %c0_114 = arith.constant 0 : index
    %326 = vector.load %arg2[%c128, %c0_114] : memref<184x128xf32, #tpu.memory_space<vmem>>, vector<1x128xf32>
    %327 = vector.extract_strided_slice %326 {offsets = [0, 0], sizes = [1, 32], strides = [1, 1]} : vector<1x128xf32> to vector<1x32xf32>
    %328 = vector.broadcast %327 : vector<1x32xf32> to vector<16x32xf32>
    %329 = arith.addf %325, %328 : vector<16x32xf32>
    %330 = vector.shape_cast %329 : vector<16x32xf32> to vector<2x8x32xf32>
    %c56 = arith.constant 56 : index
    %c0_115 = arith.constant 0 : index
    %331 = vector.load %arg2[%c56, %c0_115] : memref<184x128xf32, #tpu.memory_space<vmem>>, vector<32x128xf32>
    %332 = vector.extract_strided_slice %331 {offsets = [0, 0], sizes = [32, 32], strides = [1, 1]} : vector<32x128xf32> to vector<32x32xf32>
    %c88 = arith.constant 88 : index
    %c0_116 = arith.constant 0 : index
    %333 = vector.load %arg2[%c88, %c0_116] : memref<184x128xf32, #tpu.memory_space<vmem>>, vector<1x128xf32>
    %334 = vector.extract_strided_slice %333 {offsets = [0, 0], sizes = [1, 32], strides = [1, 1]} : vector<1x128xf32> to vector<1x32xf32>
    %c136 = arith.constant 136 : index
    %c0_117 = arith.constant 0 : index
    %335 = vector.load %arg2[%c136, %c0_117] : memref<184x128xf32, #tpu.memory_space<vmem>>, vector<1x128xf32>
    %336 = vector.extract_strided_slice %335 {offsets = [0, 0], sizes = [1, 32], strides = [1, 1]} : vector<1x128xf32> to vector<1x32xf32>
    %337 = vector.shape_cast %336 : vector<1x32xf32> to vector<1x1x32xf32>
    %cst_118 = arith.constant dense<0.000000e+00> : vector<2x32xf32>
    %338 = tpu.matmul %317, %332, %cst_118 {dimension_numbers = #tpu.dot_dimension_numbers<[1], [0], [0], [1], [0, 0, 1, 1], [], []>} : vector<2x32xf32>, vector<32x32xf32>, vector<2x32xf32> -> vector<2x32xf32>
    %339 = vector.broadcast %334 : vector<1x32xf32> to vector<2x32xf32>
    %340 = arith.addf %338, %339 : vector<2x32xf32>
    %341 = vector.shape_cast %340 : vector<2x32xf32> to vector<2x1x32xf32>
    %342 = vector.broadcast %341 : vector<2x1x32xf32> to vector<2x8x32xf32>
    %343 = arith.addf %330, %342 : vector<2x8x32xf32>
    %344 = math.tanh %343 : vector<2x8x32xf32>
    %345 = vector.broadcast %337 : vector<1x1x32xf32> to vector<2x8x32xf32>
    %346 = arith.mulf %344, %345 : vector<2x8x32xf32>
    %cst_119 = arith.constant dense<0.000000e+00> : vector<2x8xf32>
    %347 = vector.multi_reduction <add>, %346, %cst_119 [2] : vector<2x8x32xf32> to vector<2x8xf32>
    %cst_120 = arith.constant dense<0xFF800000> : vector<2xf32>
    %348 = vector.multi_reduction <maximumf>, %347, %cst_120 [1] : vector<2x8xf32> to vector<2xf32>
    %349 = vector.shape_cast %348 : vector<2xf32> to vector<2x1xf32>
    %350 = vector.broadcast %349 : vector<2x1xf32> to vector<2x8xf32>
    %351 = arith.subf %347, %350 : vector<2x8xf32>
    %352 = math.exp %351 : vector<2x8xf32>
    %cst_121 = arith.constant dense<0.000000e+00> : vector<2xf32>
    %353 = vector.multi_reduction <add>, %352, %cst_121 [1] : vector<2x8xf32> to vector<2xf32>
    %354 = vector.shape_cast %353 : vector<2xf32> to vector<2x1xf32>
    %355 = vector.broadcast %354 : vector<2x1xf32> to vector<2x8xf32>
    %356 = arith.divf %352, %355 : vector<2x8xf32>
    %357 = vector.shape_cast %356 : vector<2x8xf32> to vector<2x8x1xf32>
    %358 = vector.broadcast %357 : vector<2x8x1xf32> to vector<2x8x32xf32>
    %359 = arith.mulf %330, %358 : vector<2x8x32xf32>
    %cst_122 = arith.constant dense<0.000000e+00> : vector<2x32xf32>
    %360 = vector.multi_reduction <add>, %359, %cst_122 [1] : vector<2x8x32xf32> to vector<2x32xf32>
    %cst_123 = arith.constant dense<0.000000e+00> : vector<2x32xf32>
    %361 = tpu.matmul %360, %332, %cst_123 {dimension_numbers = #tpu.dot_dimension_numbers<[1], [0], [0], [1], [0, 0, 1, 1], [], []>} : vector<2x32xf32>, vector<32x32xf32>, vector<2x32xf32> -> vector<2x32xf32>
    %362 = vector.broadcast %334 : vector<1x32xf32> to vector<2x32xf32>
    %363 = arith.addf %361, %362 : vector<2x32xf32>
    %364 = vector.shape_cast %363 : vector<2x32xf32> to vector<2x1x32xf32>
    %365 = vector.broadcast %364 : vector<2x1x32xf32> to vector<2x8x32xf32>
    %366 = arith.addf %330, %365 : vector<2x8x32xf32>
    %367 = math.tanh %366 : vector<2x8x32xf32>
    %368 = vector.broadcast %337 : vector<1x1x32xf32> to vector<2x8x32xf32>
    %369 = arith.mulf %367, %368 : vector<2x8x32xf32>
    %cst_124 = arith.constant dense<0.000000e+00> : vector<2x8xf32>
    %370 = vector.multi_reduction <add>, %369, %cst_124 [2] : vector<2x8x32xf32> to vector<2x8xf32>
    %cst_125 = arith.constant dense<0xFF800000> : vector<2xf32>
    %371 = vector.multi_reduction <maximumf>, %370, %cst_125 [1] : vector<2x8xf32> to vector<2xf32>
    %372 = vector.shape_cast %371 : vector<2xf32> to vector<2x1xf32>
    %373 = vector.broadcast %372 : vector<2x1xf32> to vector<2x8xf32>
    %374 = arith.subf %370, %373 : vector<2x8xf32>
    %375 = math.exp %374 : vector<2x8xf32>
    %cst_126 = arith.constant dense<0.000000e+00> : vector<2xf32>
    %376 = vector.multi_reduction <add>, %375, %cst_126 [1] : vector<2x8xf32> to vector<2xf32>
    %377 = vector.shape_cast %376 : vector<2xf32> to vector<2x1xf32>
    %378 = vector.broadcast %377 : vector<2x1xf32> to vector<2x8xf32>
    %379 = arith.divf %375, %378 : vector<2x8xf32>
    %380 = vector.shape_cast %379 : vector<2x8xf32> to vector<2x8x1xf32>
    %381 = vector.broadcast %380 : vector<2x8x1xf32> to vector<2x8x32xf32>
    %382 = arith.mulf %330, %381 : vector<2x8x32xf32>
    %cst_127 = arith.constant dense<0.000000e+00> : vector<2x32xf32>
    %383 = vector.multi_reduction <add>, %382, %cst_127 [1] : vector<2x8x32xf32> to vector<2x32xf32>
    %c144 = arith.constant 144 : index
    %c0_128 = arith.constant 0 : index
    %384 = vector.load %arg2[%c144, %c0_128] : memref<184x128xf32, #tpu.memory_space<vmem>>, vector<32x128xf32>
    %385 = vector.extract_strided_slice %384 {offsets = [0, 0], sizes = [32, 32], strides = [1, 1]} : vector<32x128xf32> to vector<32x32xf32>
    %cst_129 = arith.constant dense<0.000000e+00> : vector<2x32xf32>
    %386 = tpu.matmul %383, %385, %cst_129 {dimension_numbers = #tpu.dot_dimension_numbers<[1], [0], [0], [1], [0, 0, 1, 1], [], []>} : vector<2x32xf32>, vector<32x32xf32>, vector<2x32xf32> -> vector<2x32xf32>
    %cst_130 = arith.constant 0.000000e+00 : f32
    %387 = vector.broadcast %cst_130 : f32 to vector<2x32xf32>
    %388 = arith.maximumf %386, %387 : vector<2x32xf32>
    %c176 = arith.constant 176 : index
    %c0_131 = arith.constant 0 : index
    %389 = vector.load %arg2[%c176, %c0_131] : memref<184x128xf32, #tpu.memory_space<vmem>>, vector<1x128xf32>
    %390 = vector.extract_strided_slice %389 {offsets = [0, 0], sizes = [1, 32], strides = [1, 1]} : vector<1x128xf32> to vector<1x32xf32>
    %391 = vector.broadcast %390 : vector<1x32xf32> to vector<2x32xf32>
    %392 = arith.mulf %388, %391 : vector<2x32xf32>
    %cst_132 = arith.constant dense<0.000000e+00> : vector<2xf32>
    %393 = vector.multi_reduction <add>, %392, %cst_132 [1] : vector<2x32xf32> to vector<2xf32>
    %394 = vector.shape_cast %393 : vector<2xf32> to vector<2x1xf32>
    %c0_133 = arith.constant 0 : index
    %c0_134 = arith.constant 0 : index
    %395 = vector.load %arg3[%c0_133, %c0_134] : memref<2x1xf32, #tpu.memory_space<vmem>>, vector<2x1xf32>
    tpu.vector_store %arg3[%c0_133, %c0_134], %394 {strides = array<i32>} : memref<2x1xf32, #tpu.memory_space<vmem>>, vector<2x1xf32>,
    return
  }
}

</mosaic_0001>

<llo_original>
// kernel: tpu_custom_call.1
$region0: #{tpu_custom_call.1}
  #allocation0 [shape = 'u32[]', space=smem, size = 0x4, offset = 0x4, fixed_abs, tag = 'smem constant byte address 0x4 - core index']
  #allocation1 [shape = 'u32[144,128]{1,0:T(1,128)}', space=vmem, size = 0x12000, scoped, tag = 'internal scratch']
  #allocation2 [shape = 'f32[2,8,32]{2,1,0:T(8,128)}', space=vmem, size = 0x2000, scoped, tag = 'scratch operand']
  %s0 = inlined_call_operand.vmem [shape: f32[2,8,2], index: 0, kind: input, shape index: {}]
  %s1 = inlined_call_operand.vmem [shape: f32[2,6], index: 1, kind: input, shape index: {}]
  %s2 = inlined_call_operand.hbm [shape: f32[184,128], index: 2, kind: input, shape index: {}]
  %s3 = inlined_call_operand.vmem [shape: f32[2,1], index: 3, kind: output, shape index: {}]
  %s4 = sld [smem:[#allocation0]]
  $region26: #{tpu_custom_call.1} parent=0
    _
  %s6 = ssub.s32 1, %s4
  %s7 = scalar_select 0, %s6, %s4
  $region1: #{tpu_custom_call.1} parent=0
    #allocation3 [shape = 'u8[94208]{0}', space=vmem, size = 0x17000, scoped, tag = 'input window, operand 2, single buffered']
    #allocation4 [shape = 's32[1]{0}', space=sflag, size = 0x4, scoped, tag = 'scoped memory for tpu_custom_call.1']
    %8 = vsyncpa [#allocation4], 0
    // Predicated region
    $region2: #{tpu_custom_call.1} parent=1 // pred_check
      _
    $region3: #{tpu_custom_call.1} parent=1 // pred_check_branch
      %10 = sbr.rel (0) target = $region5
    $region4: #{tpu_custom_call.1} parent=1 // pred_region
      _
    $region5: #{tpu_custom_call.1} parent=1 // pred_fallthru
      _
    // Predicated region
    $region6: #{tpu_custom_call.1} parent=1 // pred_check
      _
    $region7: #{tpu_custom_call.1} parent=1 // pred_check_branch
      %12 = sbr.rel (0) target = $region9
    $region8: #{tpu_custom_call.1} parent=1 // pred_region
      _
    $region9: #{tpu_custom_call.1} parent=1 // pred_fallthru
      _
    // Predicated region
    $region10: #{tpu_custom_call.1} parent=1 // pred_check
      _
    $region11: #{tpu_custom_call.1} parent=1 // pred_check_branch
      %14 = sbr.rel (0) target = $region13
    $region12: #{tpu_custom_call.1} parent=1 // pred_region
      %s16 = ssub.s32 2944, 2944
      %17 = vsyncadd [#allocation4], %s16
      %s18 = sshll.u32 [#allocation3], 4
      %s19 = int_to_ptr.vmem [resolvable:$true] %s18
      %24 = dma.hbm_to_vmem [thread:$0]  %s2, 2944, %s19, [#allocation4], 128, 128, 8
    $region13: #{tpu_custom_call.1} parent=1 // pred_fallthru
      _
    // Predicated region
    $region14: #{tpu_custom_call.1} parent=1 // pred_check
      _
    $region15: #{tpu_custom_call.1} parent=1 // pred_check_branch
      %26 = sbr.rel (0) target = $region17
    $region16: #{tpu_custom_call.1} parent=1 // pred_region
      %27 = dma.done [#allocation4], 2944
    $region17: #{tpu_custom_call.1} parent=1 // pred_fallthru
      _
    %v28 = vld [vmem:[%s0] sm:$0xff]
    %v29 = vld [vmem:[%s0 + $0x8] sm:$0xff]
    %v30 = vld [vmem:[#allocation3] sm:$0x3]
    %vm31 = vcmask 15360
    %v33 = vsel %vm31, %v28, 0
    %v36 = vsel %vm31, %v29, 0
    %vm38 = vcmask 1041408
    %v40 = vsel %vm38, %v30, 0
    %42 = vmatprep.subr.mxu0 0.0
    %43 = vmatpush1.msra.mxu0 0.0
    %44 = vmatprep.subr.mxu0 0.0
    %45 = vmatpush1.msra.mxu0 0.0
    %46 = vmatprep.subr.mxu0 0.0
    %47 = vmatpush1.msra.mxu0 0.0
    %48 = vmatprep.subr.mxu0 0.0
    %49 = vmatpush1.msra.mxu0 0.0
    %50 = vmatprep.subr.mxu0 0.0
    %51 = vmatpush1.msra.mxu0 0.0
    %52 = vmatprep.subr.mxu0 0.0
    %53 = vmatpush1.msra.mxu0 0.0
    %54 = vmatprep.subr.mxu0 0.0
    %55 = vmatpush1.msra.mxu0 0.0
    %56 = vmatprep.subr.mxu0 0.0
    %57 = vmatpush1.msra.mxu0 0.0
    %58 = vmatprep.subr.mxu0 0.0
    %59 = vmatpush1.msra.mxu0 0.0
    %60 = vmatprep.subr.mxu0 0.0
    %61 = vmatpush1.msra.mxu0 0.0
    %62 = vmatprep.subr.mxu0 0.0
    %63 = vmatpush1.msra.mxu0 0.0
    %64 = vmatprep.subr.mxu0 0.0
    %65 = vmatpush1.msra.mxu0 0.0
    %66 = vmatprep.subr.mxu0 0.0
    %67 = vmatpush1.msra.mxu0 0.0
    %68 = vmatprep.subr.mxu0 0.0
    %69 = vmatpush1.msra.mxu0 0.0
    %70 = vmatprep.subr.mxu0 0.0
    %71 = vmatpush1.msra.mxu0 0.0
    %72 = vmatprep.subr.mxu0 0.0
    %73 = vmatpush1.msra.mxu0 %v40
    %74 = vmatprep.subr.mxu0 0.0
    %75 = vmatpush2.msra.mxu0 0.0
    %76 = vmatprep.subr.mxu0 0.0
    %77 = vmatpush2.msra.mxu0 0.0
    %78 = vmatprep.subr.mxu0 0.0
    %79 = vmatpush2.msra.mxu0 0.0
    %80 = vmatprep.subr.mxu0 0.0
    %81 = vmatpush2.msra.mxu0 0.0
    %82 = vmatprep.subr.mxu0 0.0
    %83 = vmatpush2.msra.mxu0 0.0
    %84 = vmatprep.subr.mxu0 0.0
    %85 = vmatpush2.msra.mxu0 0.0
    %86 = vmatprep.subr.mxu0 0.0
    %87 = vmatpush2.msra.mxu0 0.0
    %88 = vmatprep.subr.mxu0 0.0
    %89 = vmatpush2.msra.mxu0 0.0
    %90 = vmatprep.subr.mxu0 0.0
    %91 = vmatpush2.msra.mxu0 0.0
    %92 = vmatprep.subr.mxu0 0.0
    %93 = vmatpush2.msra.mxu0 0.0
    %94 = vmatprep.subr.mxu0 0.0
    %95 = vmatpush2.msra.mxu0 0.0
    %96 = vmatprep.subr.mxu0 0.0
    %97 = vmatpush2.msra.mxu0 0.0
    %98 = vmatprep.subr.mxu0 0.0
    %99 = vmatpush2.msra.mxu0 0.0
    %100 = vmatprep.subr.mxu0 0.0
    %101 = vmatpush2.msra.mxu0 0.0
    %102 = vmatprep.subr.mxu0 0.0
    %103 = vmatpush2.msra.mxu0 0.0
    %104 = vmatprep.subr.mxu0 0.0
    %105 = vmatpush2.msra.mxu0 0.0
    %106 = vmatprep.mubr.f32.mxu0 0.0
    %107 = vmatmul.mubr.f32.gmra.mxu0 %v33
    %v108 = vpop.f32.mrf.mxu0
    %v109 = vadd.f32 0.0, %v108
    %v110 = vpop.f32.mrf.mxu0
    %111 = vmatprep.mubr.f32.mxu0 0.0
    %112 = vmatmul.mubr.f32.gmra.mxu0 %v36
    %v113 = vpop.f32.mrf.mxu0
    %v114 = vadd.f32 0.0, %v113
    %v115 = vpop.f32.mrf.mxu0
    %116 = vdwg.mxu0
    %v117 = vld [vmem:[%s1] sm:$0x3]
    %v118 = vld [vmem:[#allocation3 + $0x8] sm:$0x3f]
    %v119 = vld [vmem:[#allocation3 + $0x10] sm:$0x1]
    %v120 = vlaneseq
    %v121 = vshrl.u32 %v120, 7
    %v122 = vsub.s32 0, %v121
    %v123 = vrot.slane %v119, %v122
    %vm124 = vcmask 48128
    %v126 = vsel %vm124, %v117, 0
    %vm128 = vcmask 1045504
    %v130 = vsel %vm128, %v118, 0
    %132 = vmatprep.subr.mxu0 0.0
    %133 = vmatpush1.msra.mxu0 0.0
    %134 = vmatprep.subr.mxu0 0.0
    %135 = vmatpush1.msra.mxu0 0.0
    %136 = vmatprep.subr.mxu0 0.0
    %137 = vmatpush1.msra.mxu0 0.0
    %138 = vmatprep.subr.mxu0 0.0
    %139 = vmatpush1.msra.mxu0 0.0
    %140 = vmatprep.subr.mxu0 0.0
    %141 = vmatpush1.msra.mxu0 0.0
    %142 = vmatprep.subr.mxu0 0.0
    %143 = vmatpush1.msra.mxu0 0.0
    %144 = vmatprep.subr.mxu0 0.0
    %145 = vmatpush1.msra.mxu0 0.0
    %146 = vmatprep.subr.mxu0 0.0
    %147 = vmatpush1.msra.mxu0 0.0
    %148 = vmatprep.subr.mxu0 0.0
    %149 = vmatpush1.msra.mxu0 0.0
    %150 = vmatprep.subr.mxu0 0.0
    %151 = vmatpush1.msra.mxu0 0.0
    %152 = vmatprep.subr.mxu0 0.0
    %153 = vmatpush1.msra.mxu0 0.0
    %154 = vmatprep.subr.mxu0 0.0
    %155 = vmatpush1.msra.mxu0 0.0
    %156 = vmatprep.subr.mxu0 0.0
    %157 = vmatpush1.msra.mxu0 0.0
    %158 = vmatprep.subr.mxu0 0.0
    %159 = vmatpush1.msra.mxu0 0.0
    %160 = vmatprep.subr.mxu0 0.0
    %161 = vmatpush1.msra.mxu0 0.0
    %162 = vmatprep.subr.mxu0 0.0
    %163 = vmatpush1.msra.mxu0 %v130
    %164 = vmatprep.subr.mxu0 0.0
    %165 = vmatpush2.msra.mxu0 0.0
    %166 = vmatprep.subr.mxu0 0.0
    %167 = vmatpush2.msra.mxu0 0.0
    %168 = vmatprep.subr.mxu0 0.0
    %169 = vmatpush2.msra.mxu0 0.0
    %170 = vmatprep.subr.mxu0 0.0
    %171 = vmatpush2.msra.mxu0 0.0
    %172 = vmatprep.subr.mxu0 0.0
    %173 = vmatpush2.msra.mxu0 0.0
    %174 = vmatprep.subr.mxu0 0.0
    %175 = vmatpush2.msra.mxu0 0.0
    %176 = vmatprep.subr.mxu0 0.0
    %177 = vmatpush2.msra.mxu0 0.0
    %178 = vmatprep.subr.mxu0 0.0
    %179 = vmatpush2.msra.mxu0 0.0
    %180 = vmatprep.subr.mxu0 0.0
    %181 = vmatpush2.msra.mxu0 0.0
    %182 = vmatprep.subr.mxu0 0.0
    %183 = vmatpush2.msra.mxu0 0.0
    %184 = vmatprep.subr.mxu0 0.0
    %185 = vmatpush2.msra.mxu0 0.0
    %186 = vmatprep.subr.mxu0 0.0
    %187 = vmatpush2.msra.mxu0 0.0
    %188 = vmatprep.subr.mxu0 0.0
    %189 = vmatpush2.msra.mxu0 0.0
    %190 = vmatprep.subr.mxu0 0.0
    %191 = vmatpush2.msra.mxu0 0.0
    %192 = vmatprep.subr.mxu0 0.0
    %193 = vmatpush2.msra.mxu0 0.0
    %194 = vmatprep.subr.mxu0 0.0
    %195 = vmatpush2.msra.mxu0 0.0
    %196 = vmatprep.mubr.f32.mxu0 0.0
    %197 = vmatmul.mubr.f32.gmra.mxu0 %v126
    %v198 = vpop.f32.mrf.mxu0
    %v199 = vadd.f32 %v123, %v198
    %v200 = vpop.f32.mrf.mxu0
    %201 = vdwg.mxu0
    %v204 = vunpack.c.l.s4 1966171168
    %v205 = vunpack.c.0.s8 %v204
    %v206 = vlaneseq
    %v207 = vshrl.u32 %v206, 7
    %v208 = vsub.s32 %v205, %v207
    %v209 = vrot.slane %v199, %v208
    %v210 = vcombine.high %v209, %v209
    %v212 = vunpack.c.l.s4 1966171168
    %v213 = vunpack.c.0.s8 %v212
    %v214 = vlaneseq
    %v215 = vshrl.u32 %v214, 7
    %v216 = vsub.s32 %v213, %v215
    %v217 = vrot.slane %v209, %v216
    %v219 = vunpack.c.l.s4 1966171168
    %v220 = vunpack.c.0.s8 %v219
    %v221 = vlaneseq
    %v222 = vshrl.u32 %v221, 7
    %v223 = vsub.s32 %v220, %v222
    %v224 = vrot.slane %v210, %v223
    %v225 = vlaneseq
    %v226 = vshrl.u32 %v225, 7
    %v227 = vsub.s32 0, %v226
    %v228 = vrot.slane %v217, %v227
    %v229 = vlaneseq
    %v230 = vshrl.u32 %v229, 7
    %v231 = vsub.s32 0, %v230
    %v232 = vrot.slane %v224, %v231
    %v235 = vadd.f32 %v109, %v228
    %v236 = vadd.f32 %v114, %v232
    %v237 = vld [vmem:[#allocation3 + $0x18] sm:$0xff]
    %v238 = vld [vmem:[#allocation3 + $0x20] sm:$0xff]
    %v239 = vld [vmem:[#allocation3 + $0x28] sm:$0xff]
    %v240 = vld [vmem:[#allocation3 + $0x30] sm:$0xff]
    %vm241 = vcmask 261120
    %v243 = vsel %vm241, 0.0, 0
    %245 = vmatprep.subr.mxu0 0.0
    %246 = vmatpush1.msra.mxu0 0.0
    %247 = vmatprep.subr.mxu0 0.0
    %248 = vmatpush1.msra.mxu0 0.0
    %249 = vmatprep.subr.mxu0 0.0
    %250 = vmatpush1.msra.mxu0 0.0
    %251 = vmatprep.subr.mxu0 0.0
    %252 = vmatpush1.msra.mxu0 0.0
    %253 = vmatprep.subr.mxu0 0.0
    %254 = vmatpush1.msra.mxu0 0.0
    %255 = vmatprep.subr.mxu0 0.0
    %256 = vmatpush1.msra.mxu0 0.0
    %257 = vmatprep.subr.mxu0 0.0
    %258 = vmatpush1.msra.mxu0 0.0
    %259 = vmatprep.subr.mxu0 0.0
    %260 = vmatpush1.msra.mxu0 0.0
    %261 = vmatprep.subr.mxu0 0.0
    %262 = vmatpush1.msra.mxu0 0.0
    %263 = vmatprep.subr.mxu0 0.0
    %264 = vmatpush1.msra.mxu0 0.0
    %265 = vmatprep.subr.mxu0 0.0
    %266 = vmatpush1.msra.mxu0 0.0
    %267 = vmatprep.subr.mxu0 0.0
    %268 = vmatpush1.msra.mxu0 0.0
    %269 = vmatprep.subr.mxu0 0.0
    %270 = vmatpush1.msra.mxu0 %v240
    %271 = vmatprep.subr.mxu0 0.0
    %272 = vmatpush1.msra.mxu0 %v239
    %273 = vmatprep.subr.mxu0 0.0
    %274 = vmatpush1.msra.mxu0 %v238
    %275 = vmatprep.subr.mxu0 0.0
    %276 = vmatpush1.msra.mxu0 %v237
    %277 = vmatprep.subr.mxu0 0.0
    %278 = vmatpush2.msra.mxu0 0.0
    %279 = vmatprep.subr.mxu0 0.0
    %280 = vmatpush2.msra.mxu0 0.0
    %281 = vmatprep.subr.mxu0 0.0
    %282 = vmatpush2.msra.mxu0 0.0
    %283 = vmatprep.subr.mxu0 0.0
    %284 = vmatpush2.msra.mxu0 0.0
    %285 = vmatprep.subr.mxu0 0.0
    %286 = vmatpush2.msra.mxu0 0.0
    %287 = vmatprep.subr.mxu0 0.0
    %288 = vmatpush2.msra.mxu0 0.0
    %289 = vmatprep.subr.mxu0 0.0
    %290 = vmatpush2.msra.mxu0 0.0
    %291 = vmatprep.subr.mxu0 0.0
    %292 = vmatpush2.msra.mxu0 0.0
    %293 = vmatprep.subr.mxu0 0.0
    %294 = vmatpush2.msra.mxu0 0.0
    %295 = vmatprep.subr.mxu0 0.0
    %296 = vmatpush2.msra.mxu0 0.0
    %297 = vmatprep.subr.mxu0 0.0
    %298 = vmatpush2.msra.mxu0 0.0
    %299 = vmatprep.subr.mxu0 0.0
    %300 = vmatpush2.msra.mxu0 0.0
    %301 = vmatprep.subr.mxu0 0.0
    %302 = vmatpush2.msra.mxu0 0.0
    %303 = vmatprep.subr.mxu0 0.0
    %304 = vmatpush2.msra.mxu0 0.0
    %305 = vmatprep.subr.mxu0 0.0
    %306 = vmatpush2.msra.mxu0 0.0
    %307 = vmatprep.subr.mxu0 0.0
    %308 = vmatpush2.msra.mxu0 0.0
    %309 = vmatprep.mubr.f32.mxu0 0.0
    %310 = vmatmul.mubr.f32.gmra.mxu0 %v243
    %v311 = vpop.f32.mrf.mxu0
    %v312 = vadd.f32 0.0, %v311
    %v313 = vpop.f32.mrf.mxu0
    %314 = vdwg.mxu0
    %v316 = vrot.slane %v312, 1
    %v319 = vadd.f32 %v235, %v312
    %v320 = vadd.f32 %v236, %v316
    %v321 = vmul.f32 %v319, 0.5
    %v322 = vmul.f32 %v320, 0.5
    %v323 = vtanh.pop %v321
    %v324 = vtanh.pop %v322
    %v325 = vadd.f32 %v323, 1.0
    %v326 = vadd.f32 %v324, 1.0
    %v327 = vmul.f32 %v325, 0.5
    %v328 = vmul.f32 %v326, 0.5
    %v329 = vtanh.pop %v319
    %v330 = vtanh.pop %v320
    %v331 = vmul.f32 %v327, 0.0
    %v332 = vmul.f32 %v328, 0.0
    %335 = vrot.lane.b32.xlu0 %v329, 64
    %v336 = vpop.permute.xlu0 %335
    %337 = vrot.lane.b32.xlu0 %v330, 64
    %v338 = vpop.permute.xlu0 %337
    %v341 = vmul.f32 %v327, %v336
    %v342 = vmul.f32 %v328, %v338
    %345 = vrot.lane.b32.xlu0 %v341, 32
    %v346 = vpop.permute.xlu0 %345
    %347 = vrot.lane.b32.xlu0 %v342, 32
    %v348 = vpop.permute.xlu0 %347
    %v351 = vadd.f32 %v331, %v346
    %v352 = vadd.f32 %v332, %v348
    %v353 = vtanh.pop %v351
    %v354 = vtanh.pop %v352
    %357 = vrot.lane.b32.xlu0 %v353, 64
    %v358 = vpop.permute.xlu0 %357
    %359 = vrot.lane.b32.xlu0 %v354, 64
    %v360 = vpop.permute.xlu0 %359
    %v363 = vmul.f32 %v327, %v358
    %v364 = vmul.f32 %v328, %v360
    %367 = vrot.lane.b32.xlu0 %v363, 32
    %v368 = vpop.permute.xlu0 %367
    %369 = vrot.lane.b32.xlu0 %v364, 32
    %v370 = vpop.permute.xlu0 %369
    %vm373 = vcmask 253952
    %374 = vst.msk [vmem:[#allocation2] sm:$0x1] %vm373, %v368
    %375 = vst.msk [vmem:[#allocation2 + $0x8] sm:$0x1] %vm373, %v370
    %v376 = vrot.slane %v364, 7
    %vm377 = vcmask 1041409
    %v378 = vsel %vm377, %v376, %v363
    %379 = vrot.lane.b32.xlu0 %v378, 32
    %v380 = vpop.permute.xlu0 %379
    %v381 = vsel %vm241, %v380, 0
    %383 = vmatprep.subr.mxu0 0.0
    %384 = vmatpush1.msra.mxu0 0.0
    %385 = vmatprep.subr.mxu0 0.0
    %386 = vmatpush1.msra.mxu0 0.0
    %387 = vmatprep.subr.mxu0 0.0
    %388 = vmatpush1.msra.mxu0 0.0
    %389 = vmatprep.subr.mxu0 0.0
    %390 = vmatpush1.msra.mxu0 0.0
    %391 = vmatprep.subr.mxu0 0.0
    %392 = vmatpush1.msra.mxu0 0.0
    %393 = vmatprep.subr.mxu0 0.0
    %394 = vmatpush1.msra.mxu0 0.0
    %395 = vmatprep.subr.mxu0 0.0
    %396 = vmatpush1.msra.mxu0 0.0
    %397 = vmatprep.subr.mxu0 0.0
    %398 = vmatpush1.msra.mxu0 0.0
    %399 = vmatprep.subr.mxu0 0.0
    %400 = vmatpush1.msra.mxu0 0.0
    %401 = vmatprep.subr.mxu0 0.0
    %402 = vmatpush1.msra.mxu0 0.0
    %403 = vmatprep.subr.mxu0 0.0
    %404 = vmatpush1.msra.mxu0 0.0
    %405 = vmatprep.subr.mxu0 0.0
    %406 = vmatpush1.msra.mxu0 0.0
    %407 = vmatprep.subr.mxu0 0.0
    %408 = vmatpush1.msra.mxu0 %v240
    %409 = vmatprep.subr.mxu0 0.0
    %410 = vmatpush1.msra.mxu0 %v239
    %411 = vmatprep.subr.mxu0 0.0
    %412 = vmatpush1.msra.mxu0 %v238
    %413 = vmatprep.subr.mxu0 0.0
    %414 = vmatpush1.msra.mxu0 %v237
    %415 = vmatprep.subr.mxu0 0.0
    %416 = vmatpush2.msra.mxu0 0.0
    %417 = vmatprep.subr.mxu0 0.0
    %418 = vmatpush2.msra.mxu0 0.0
    %419 = vmatprep.subr.mxu0 0.0
    %420 = vmatpush2.msra.mxu0 0.0
    %421 = vmatprep.subr.mxu0 0.0
    %422 = vmatpush2.msra.mxu0 0.0
    %423 = vmatprep.subr.mxu0 0.0
    %424 = vmatpush2.msra.mxu0 0.0
    %425 = vmatprep.subr.mxu0 0.0
    %426 = vmatpush2.msra.mxu0 0.0
    %427 = vmatprep.subr.mxu0 0.0
    %428 = vmatpush2.msra.mxu0 0.0
    %429 = vmatprep.subr.mxu0 0.0
    %430 = vmatpush2.msra.mxu0 0.0
    %431 = vmatprep.subr.mxu0 0.0
    %432 = vmatpush2.msra.mxu0 0.0
    %433 = vmatprep.subr.mxu0 0.0
    %434 = vmatpush2.msra.mxu0 0.0
    %435 = vmatprep.subr.mxu0 0.0
    %436 = vmatpush2.msra.mxu0 0.0
    %437 = vmatprep.subr.mxu0 0.0
    %438 = vmatpush2.msra.mxu0 0.0
    %439 = vmatprep.subr.mxu0 0.0
    %440 = vmatpush2.msra.mxu0 0.0
    %441 = vmatprep.subr.mxu0 0.0
    %442 = vmatpush2.msra.mxu0 0.0
    %443 = vmatprep.subr.mxu0 0.0
    %444 = vmatpush2.msra.mxu0 0.0
    %445 = vmatprep.subr.mxu0 0.0
    %446 = vmatpush2.msra.mxu0 0.0
    %447 = vmatprep.mubr.f32.mxu0 0.0
    %448 = vmatmul.mubr.f32.gmra.mxu0 %v381
    %v449 = vpop.f32.mrf.mxu0
    %v450 = vadd.f32 0.0, %v449
    %v451 = vpop.f32.mrf.mxu0
    %452 = vdwg.mxu0
    %v454 = vrot.slane %v450, 7
    %v457 = vadd.f32 %v235, %v454
    %v458 = vadd.f32 %v236, %v450
    %v459 = vmul.f32 %v457, 0.5
    %v460 = vmul.f32 %v458, 0.5
    %v461 = vtanh.pop %v459
    %v462 = vtanh.pop %v460
    %v463 = vadd.f32 %v461, 1.0
    %v464 = vadd.f32 %v462, 1.0
    %v465 = vmul.f32 %v463, 0.5
    %v466 = vmul.f32 %v464, 0.5
    %v467 = vtanh.pop %v457
    %v468 = vtanh.pop %v458
    %v471 = vrot.slane %v351, 7
    %v472 = vrot.slane %v352, 7
    %v475 = vmul.f32 %v465, %v471
    %v476 = vmul.f32 %v466, %v472
    %479 = vrot.lane.b32.xlu0 %v467, 64
    %v480 = vpop.permute.xlu0 %479
    %481 = vrot.lane.b32.xlu0 %v468, 64
    %v482 = vpop.permute.xlu0 %481
    %v485 = vmul.f32 %v465, %v480
    %v486 = vmul.f32 %v466, %v482
    %489 = vrot.lane.b32.xlu0 %v485, 32
    %v490 = vpop.permute.xlu0 %489
    %491 = vrot.lane.b32.xlu0 %v486, 32
    %v492 = vpop.permute.xlu0 %491
    %v495 = vadd.f32 %v475, %v490
    %v496 = vadd.f32 %v476, %v492
    %v497 = vtanh.pop %v495
    %v498 = vtanh.pop %v496
    %501 = vrot.lane.b32.xlu0 %v497, 64
    %v502 = vpop.permute.xlu0 %501
    %503 = vrot.lane.b32.xlu0 %v498, 64
    %v504 = vpop.permute.xlu0 %503
    %v507 = vmul.f32 %v465, %v502
    %v508 = vmul.f32 %v466, %v504
    %511 = vrot.lane.b32.xlu0 %v507, 32
    %v512 = vpop.permute.xlu0 %511
    %513 = vrot.lane.b32.xlu0 %v508, 32
    %v514 = vpop.permute.xlu0 %513
    %vm517 = vcmask 254977
    %518 = vst.msk [vmem:[#allocation2] sm:$0x2] %vm517, %v512
    %519 = vst.msk [vmem:[#allocation2 + $0x8] sm:$0x2] %vm517, %v514
    %v520 = vrot.slane %v507, 1
    %v521 = vsel %vm377, %v508, %v520
    %522 = vrot.lane.b32.xlu0 %v521, 32
    %v523 = vpop.permute.xlu0 %522
    %v524 = vsel %vm241, %v523, 0
    %526 = vmatprep.subr.mxu0 0.0
    %527 = vmatpush1.msra.mxu0 0.0
    %528 = vmatprep.subr.mxu0 0.0
    %529 = vmatpush1.msra.mxu0 0.0
    %530 = vmatprep.subr.mxu0 0.0
    %531 = vmatpush1.msra.mxu0 0.0
    %532 = vmatprep.subr.mxu0 0.0
    %533 = vmatpush1.msra.mxu0 0.0
    %534 = vmatprep.subr.mxu0 0.0
    %535 = vmatpush1.msra.mxu0 0.0
    %536 = vmatprep.subr.mxu0 0.0
    %537 = vmatpush1.msra.mxu0 0.0
    %538 = vmatprep.subr.mxu0 0.0
    %539 = vmatpush1.msra.mxu0 0.0
    %540 = vmatprep.subr.mxu0 0.0
    %541 = vmatpush1.msra.mxu0 0.0
    %542 = vmatprep.subr.mxu0 0.0
    %543 = vmatpush1.msra.mxu0 0.0
    %544 = vmatprep.subr.mxu0 0.0
    %545 = vmatpush1.msra.mxu0 0.0
    %546 = vmatprep.subr.mxu0 0.0
    %547 = vmatpush1.msra.mxu0 0.0
    %548 = vmatprep.subr.mxu0 0.0
    %549 = vmatpush1.msra.mxu0 0.0
    %550 = vmatprep.subr.mxu0 0.0
    %551 = vmatpush1.msra.mxu0 %v240
    %552 = vmatprep.subr.mxu0 0.0
    %553 = vmatpush1.msra.mxu0 %v239
    %554 = vmatprep.subr.mxu0 0.0
    %555 = vmatpush1.msra.mxu0 %v238
    %556 = vmatprep.subr.mxu0 0.0
    %557 = vmatpush1.msra.mxu0 %v237
    %558 = vmatprep.subr.mxu0 0.0
    %559 = vmatpush2.msra.mxu0 0.0
    %560 = vmatprep.subr.mxu0 0.0
    %561 = vmatpush2.msra.mxu0 0.0
    %562 = vmatprep.subr.mxu0 0.0
    %563 = vmatpush2.msra.mxu0 0.0
    %564 = vmatprep.subr.mxu0 0.0
    %565 = vmatpush2.msra.mxu0 0.0
    %566 = vmatprep.subr.mxu0 0.0
    %567 = vmatpush2.msra.mxu0 0.0
    %568 = vmatprep.subr.mxu0 0.0
    %569 = vmatpush2.msra.mxu0 0.0
    %570 = vmatprep.subr.mxu0 0.0
    %571 = vmatpush2.msra.mxu0 0.0
    %572 = vmatprep.subr.mxu0 0.0
    %573 = vmatpush2.msra.mxu0 0.0
    %574 = vmatprep.subr.mxu0 0.0
    %575 = vmatpush2.msra.mxu0 0.0
    %576 = vmatprep.subr.mxu0 0.0
    %577 = vmatpush2.msra.mxu0 0.0
    %578 = vmatprep.subr.mxu0 0.0
    %579 = vmatpush2.msra.mxu0 0.0
    %580 = vmatprep.subr.mxu0 0.0
    %581 = vmatpush2.msra.mxu0 0.0
    %582 = vmatprep.subr.mxu0 0.0
    %583 = vmatpush2.msra.mxu0 0.0
    %584 = vmatprep.subr.mxu0 0.0
    %585 = vmatpush2.msra.mxu0 0.0
    %586 = vmatprep.subr.mxu0 0.0
    %587 = vmatpush2.msra.mxu0 0.0
    %588 = vmatprep.subr.mxu0 0.0
    %589 = vmatpush2.msra.mxu0 0.0
    %590 = vmatprep.mubr.f32.mxu0 0.0
    %591 = vmatmul.mubr.f32.gmra.mxu0 %v524
    %v592 = vpop.f32.mrf.mxu0
    %v593 = vadd.f32 0.0, %v592
    %v594 = vpop.f32.mrf.mxu0
    %595 = vdwg.mxu0
    %v597 = vrot.slane %v593, 6
    %v598 = vrot.slane %v593, 7
    %v601 = vadd.f32 %v235, %v597
    %v602 = vadd.f32 %v236, %v598
    %v603 = vmul.f32 %v601, 0.5
    %v604 = vmul.f32 %v602, 0.5
    %v605 = vtanh.pop %v603
    %v606 = vtanh.pop %v604
    %v607 = vadd.f32 %v605, 1.0
    %v608 = vadd.f32 %v606, 1.0
    %v609 = vmul.f32 %v607, 0.5
    %v610 = vmul.f32 %v608, 0.5
    %v611 = vtanh.pop %v601
    %v612 = vtanh.pop %v602
    %v615 = vrot.slane %v495, 7
    %v616 = vrot.slane %v496, 7
    %v619 = vmul.f32 %v609, %v615
    %v620 = vmul.f32 %v610, %v616
    %623 = vrot.lane.b32.xlu0 %v611, 64
    %v624 = vpop.permute.xlu0 %623
    %625 = vrot.lane.b32.xlu0 %v612, 64
    %v626 = vpop.permute.xlu0 %625
    %v629 = vmul.f32 %v609, %v624
    %v630 = vmul.f32 %v610, %v626
    %633 = vrot.lane.b32.xlu0 %v629, 32
    %v634 = vpop.permute.xlu0 %633
    %635 = vrot.lane.b32.xlu0 %v630, 32
    %v636 = vpop.permute.xlu0 %635
    %v639 = vadd.f32 %v619, %v634
    %v640 = vadd.f32 %v620, %v636
    %v641 = vtanh.pop %v639
    %v642 = vtanh.pop %v640
    %645 = vrot.lane.b32.xlu0 %v641, 64
    %v646 = vpop.permute.xlu0 %645
    %647 = vrot.lane.b32.xlu0 %v642, 64
    %v648 = vpop.permute.xlu0 %647
    %v651 = vmul.f32 %v609, %v646
    %v652 = vmul.f32 %v610, %v648
    %655 = vrot.lane.b32.xlu0 %v651, 32
    %v656 = vpop.permute.xlu0 %655
    %657 = vrot.lane.b32.xlu0 %v652, 32
    %v658 = vpop.permute.xlu0 %657
    %vm661 = vcmask 256002
    %662 = vst.msk [vmem:[#allocation2] sm:$0x4] %vm661, %v656
    %663 = vst.msk [vmem:[#allocation2 + $0x8] sm:$0x4] %vm661, %v658
    %v664 = vrot.slane %v651, 2
    %v665 = vrot.slane %v652, 1
    %v666 = vsel %vm377, %v665, %v664
    %667 = vrot.lane.b32.xlu0 %v666, 32
    %v668 = vpop.permute.xlu0 %667
    %v669 = vsel %vm241, %v668, 0
    %671 = vmatprep.subr.mxu0 0.0
    %672 = vmatpush1.msra.mxu0 0.0
    %673 = vmatprep.subr.mxu0 0.0
    %674 = vmatpush1.msra.mxu0 0.0
    %675 = vmatprep.subr.mxu0 0.0
    %676 = vmatpush1.msra.mxu0 0.0
    %677 = vmatprep.subr.mxu0 0.0
    %678 = vmatpush1.msra.mxu0 0.0
    %679 = vmatprep.subr.mxu0 0.0
    %680 = vmatpush1.msra.mxu0 0.0
    %681 = vmatprep.subr.mxu0 0.0
    %682 = vmatpush1.msra.mxu0 0.0
    %683 = vmatprep.subr.mxu0 0.0
    %684 = vmatpush1.msra.mxu0 0.0
    %685 = vmatprep.subr.mxu0 0.0
    %686 = vmatpush1.msra.mxu0 0.0
    %687 = vmatprep.subr.mxu0 0.0
    %688 = vmatpush1.msra.mxu0 0.0
    %689 = vmatprep.subr.mxu0 0.0
    %690 = vmatpush1.msra.mxu0 0.0
    %691 = vmatprep.subr.mxu0 0.0
    %692 = vmatpush1.msra.mxu0 0.0
    %693 = vmatprep.subr.mxu0 0.0
    %694 = vmatpush1.msra.mxu0 0.0
    %695 = vmatprep.subr.mxu0 0.0
    %696 = vmatpush1.msra.mxu0 %v240
    %697 = vmatprep.subr.mxu0 0.0
    %698 = vmatpush1.msra.mxu0 %v239
    %699 = vmatprep.subr.mxu0 0.0
    %700 = vmatpush1.msra.mxu0 %v238
    %701 = vmatprep.subr.mxu0 0.0
    %702 = vmatpush1.msra.mxu0 %v237
    %703 = vmatprep.subr.mxu0 0.0
    %704 = vmatpush2.msra.mxu0 0.0
    %705 = vmatprep.subr.mxu0 0.0
    %706 = vmatpush2.msra.mxu0 0.0
    %707 = vmatprep.subr.mxu0 0.0
    %708 = vmatpush2.msra.mxu0 0.0
    %709 = vmatprep.subr.mxu0 0.0
    %710 = vmatpush2.msra.mxu0 0.0
    %711 = vmatprep.subr.mxu0 0.0
    %712 = vmatpush2.msra.mxu0 0.0
    %713 = vmatprep.subr.mxu0 0.0
    %714 = vmatpush2.msra.mxu0 0.0
    %715 = vmatprep.subr.mxu0 0.0
    %716 = vmatpush2.msra.mxu0 0.0
    %717 = vmatprep.subr.mxu0 0.0
    %718 = vmatpush2.msra.mxu0 0.0
    %719 = vmatprep.subr.mxu0 0.0
    %720 = vmatpush2.msra.mxu0 0.0
    %721 = vmatprep.subr.mxu0 0.0
    %722 = vmatpush2.msra.mxu0 0.0
    %723 = vmatprep.subr.mxu0 0.0
    %724 = vmatpush2.msra.mxu0 0.0
    %725 = vmatprep.subr.mxu0 0.0
    %726 = vmatpush2.msra.mxu0 0.0
    %727 = vmatprep.subr.mxu0 0.0
    %728 = vmatpush2.msra.mxu0 0.0
    %729 = vmatprep.subr.mxu0 0.0
    %730 = vmatpush2.msra.mxu0 0.0
    %731 = vmatprep.subr.mxu0 0.0
    %732 = vmatpush2.msra.mxu0 0.0
    %733 = vmatprep.subr.mxu0 0.0
    %734 = vmatpush2.msra.mxu0 0.0
    %735 = vmatprep.mubr.f32.mxu0 0.0
    %736 = vmatmul.mubr.f32.gmra.mxu0 %v669
    %v737 = vpop.f32.mrf.mxu0
    %v738 = vadd.f32 0.0, %v737
    %v739 = vpop.f32.mrf.mxu0
    %740 = vdwg.mxu0
    %v742 = vrot.slane %v738, 5
    %v743 = vrot.slane %v738, 6
    %v746 = vadd.f32 %v235, %v742
    %v747 = vadd.f32 %v236, %v743
    %v748 = vmul.f32 %v746, 0.5
    %v749 = vmul.f32 %v747, 0.5
    %v750 = vtanh.pop %v748
    %v751 = vtanh.pop %v749
    %v752 = vadd.f32 %v750, 1.0
    %v753 = vadd.f32 %v751, 1.0
    %v754 = vmul.f32 %v752, 0.5
    %v755 = vmul.f32 %v753, 0.5
    %v756 = vtanh.pop %v746
    %v757 = vtanh.pop %v747
    %v760 = vrot.slane %v639, 7
    %v761 = vrot.slane %v640, 7
    %v764 = vmul.f32 %v754, %v760
    %v765 = vmul.f32 %v755, %v761
    %768 = vrot.lane.b32.xlu0 %v756, 64
    %v769 = vpop.permute.xlu0 %768
    %770 = vrot.lane.b32.xlu0 %v757, 64
    %v771 = vpop.permute.xlu0 %770
    %v774 = vmul.f32 %v754, %v769
    %v775 = vmul.f32 %v755, %v771
    %778 = vrot.lane.b32.xlu0 %v774, 32
    %v779 = vpop.permute.xlu0 %778
    %780 = vrot.lane.b32.xlu0 %v775, 32
    %v781 = vpop.permute.xlu0 %780
    %v784 = vadd.f32 %v764, %v779
    %v785 = vadd.f32 %v765, %v781
    %v786 = vtanh.pop %v784
    %v787 = vtanh.pop %v785
    %790 = vrot.lane.b32.xlu0 %v786, 64
    %v791 = vpop.permute.xlu0 %790
    %792 = vrot.lane.b32.xlu0 %v787, 64
    %v793 = vpop.permute.xlu0 %792
    %v796 = vmul.f32 %v754, %v791
    %v797 = vmul.f32 %v755, %v793
    %800 = vrot.lane.b32.xlu0 %v796, 32
    %v801 = vpop.permute.xlu0 %800
    %802 = vrot.lane.b32.xlu0 %v797, 32
    %v803 = vpop.permute.xlu0 %802
    %vm806 = vcmask 257027
    %807 = vst.msk [vmem:[#allocation2] sm:$0x8] %vm806, %v801
    %808 = vst.msk [vmem:[#allocation2 + $0x8] sm:$0x8] %vm806, %v803
    %v809 = vrot.slane %v796, 3
    %v810 = vrot.slane %v797, 2
    %v811 = vsel %vm377, %v810, %v809
    %812 = vrot.lane.b32.xlu0 %v811, 32
    %v813 = vpop.permute.xlu0 %812
    %v814 = vsel %vm241, %v813, 0
    %816 = vmatprep.subr.mxu0 0.0
    %817 = vmatpush1.msra.mxu0 0.0
    %818 = vmatprep.subr.mxu0 0.0
    %819 = vmatpush1.msra.mxu0 0.0
    %820 = vmatprep.subr.mxu0 0.0
    %821 = vmatpush1.msra.mxu0 0.0
    %822 = vmatprep.subr.mxu0 0.0
    %823 = vmatpush1.msra.mxu0 0.0
    %824 = vmatprep.subr.mxu0 0.0
    %825 = vmatpush1.msra.mxu0 0.0
    %826 = vmatprep.subr.mxu0 0.0
    %827 = vmatpush1.msra.mxu0 0.0
    %828 = vmatprep.subr.mxu0 0.0
    %829 = vmatpush1.msra.mxu0 0.0
    %830 = vmatprep.subr.mxu0 0.0
    %831 = vmatpush1.msra.mxu0 0.0
    %832 = vmatprep.subr.mxu0 0.0
    %833 = vmatpush1.msra.mxu0 0.0
    %834 = vmatprep.subr.mxu0 0.0
    %835 = vmatpush1.msra.mxu0 0.0
    %836 = vmatprep.subr.mxu0 0.0
    %837 = vmatpush1.msra.mxu0 0.0
    %838 = vmatprep.subr.mxu0 0.0
    %839 = vmatpush1.msra.mxu0 0.0
    %840 = vmatprep.subr.mxu0 0.0
    %841 = vmatpush1.msra.mxu0 %v240
    %842 = vmatprep.subr.mxu0 0.0
    %843 = vmatpush1.msra.mxu0 %v239
    %844 = vmatprep.subr.mxu0 0.0
    %845 = vmatpush1.msra.mxu0 %v238
    %846 = vmatprep.subr.mxu0 0.0
    %847 = vmatpush1.msra.mxu0 %v237
    %848 = vmatprep.subr.mxu0 0.0
    %849 = vmatpush2.msra.mxu0 0.0
    %850 = vmatprep.subr.mxu0 0.0
    %851 = vmatpush2.msra.mxu0 0.0
    %852 = vmatprep.subr.mxu0 0.0
    %853 = vmatpush2.msra.mxu0 0.0
    %854 = vmatprep.subr.mxu0 0.0
    %855 = vmatpush2.msra.mxu0 0.0
    %856 = vmatprep.subr.mxu0 0.0
    %857 = vmatpush2.msra.mxu0 0.0
    %858 = vmatprep.subr.mxu0 0.0
    %859 = vmatpush2.msra.mxu0 0.0
    %860 = vmatprep.subr.mxu0 0.0
    %861 = vmatpush2.msra.mxu0 0.0
    %862 = vmatprep.subr.mxu0 0.0
    %863 = vmatpush2.msra.mxu0 0.0
    %864 = vmatprep.subr.mxu0 0.0
    %865 = vmatpush2.msra.mxu0 0.0
    %866 = vmatprep.subr.mxu0 0.0
    %867 = vmatpush2.msra.mxu0 0.0
    %868 = vmatprep.subr.mxu0 0.0
    %869 = vmatpush2.msra.mxu0 0.0
    %870 = vmatprep.subr.mxu0 0.0
    %871 = vmatpush2.msra.mxu0 0.0
    %872 = vmatprep.subr.mxu0 0.0
    %873 = vmatpush2.msra.mxu0 0.0
    %874 = vmatprep.subr.mxu0 0.0
    %875 = vmatpush2.msra.mxu0 0.0
    %876 = vmatprep.subr.mxu0 0.0
    %877 = vmatpush2.msra.mxu0 0.0
    %878 = vmatprep.subr.mxu0 0.0
    %879 = vmatpush2.msra.mxu0 0.0
    %880 = vmatprep.mubr.f32.mxu0 0.0
    %881 = vmatmul.mubr.f32.gmra.mxu0 %v814
    %v882 = vpop.f32.mrf.mxu0
    %v883 = vadd.f32 0.0, %v882
    %v884 = vpop.f32.mrf.mxu0
    %885 = vdwg.mxu0
    %v887 = vrot.slane %v883, 4
    %v888 = vrot.slane %v883, 5
    %v891 = vadd.f32 %v235, %v887
    %v892 = vadd.f32 %v236, %v888
    %v893 = vmul.f32 %v891, 0.5
    %v894 = vmul.f32 %v892, 0.5
    %v895 = vtanh.pop %v893
    %v896 = vtanh.pop %v894
    %v897 = vadd.f32 %v895, 1.0
    %v898 = vadd.f32 %v896, 1.0
    %v899 = vmul.f32 %v897, 0.5
    %v900 = vmul.f32 %v898, 0.5
    %v901 = vtanh.pop %v891
    %v902 = vtanh.pop %v892
    %v905 = vrot.slane %v784, 7
    %v906 = vrot.slane %v785, 7
    %v909 = vmul.f32 %v899, %v905
    %v910 = vmul.f32 %v900, %v906
    %913 = vrot.lane.b32.xlu0 %v901, 64
    %v914 = vpop.permute.xlu0 %913
    %915 = vrot.lane.b32.xlu0 %v902, 64
    %v916 = vpop.permute.xlu0 %915
    %v919 = vmul.f32 %v899, %v914
    %v920 = vmul.f32 %v900, %v916
    %923 = vrot.lane.b32.xlu0 %v919, 32
    %v924 = vpop.permute.xlu0 %923
    %925 = vrot.lane.b32.xlu0 %v920, 32
    %v926 = vpop.permute.xlu0 %925
    %v929 = vadd.f32 %v909, %v924
    %v930 = vadd.f32 %v910, %v926
    %v931 = vtanh.pop %v929
    %v932 = vtanh.pop %v930
    %935 = vrot.lane.b32.xlu0 %v931, 64
    %v936 = vpop.permute.xlu0 %935
    %937 = vrot.lane.b32.xlu0 %v932, 64
    %v938 = vpop.permute.xlu0 %937
    %v941 = vmul.f32 %v899, %v936
    %v942 = vmul.f32 %v900, %v938
    %945 = vrot.lane.b32.xlu0 %v941, 32
    %v946 = vpop.permute.xlu0 %945
    %947 = vrot.lane.b32.xlu0 %v942, 32
    %v948 = vpop.permute.xlu0 %947
    %vm951 = vcmask 258052
    %952 = vst.msk [vmem:[#allocation2] sm:$0x10] %vm951, %v946
    %953 = vst.msk [vmem:[#allocation2 + $0x8] sm:$0x10] %vm951, %v948
    %v954 = vrot.slane %v941, 4
    %v955 = vrot.slane %v942, 3
    %v956 = vsel %vm377, %v955, %v954
    %957 = vrot.lane.b32.xlu0 %v956, 32
    %v958 = vpop.permute.xlu0 %957
    %v959 = vsel %vm241, %v958, 0
    %961 = vmatprep.subr.mxu0 0.0
    %962 = vmatpush1.msra.mxu0 0.0
    %963 = vmatprep.subr.mxu0 0.0
    %964 = vmatpush1.msra.mxu0 0.0
    %965 = vmatprep.subr.mxu0 0.0
    %966 = vmatpush1.msra.mxu0 0.0
    %967 = vmatprep.subr.mxu0 0.0
    %968 = vmatpush1.msra.mxu0 0.0
    %969 = vmatprep.subr.mxu0 0.0
    %970 = vmatpush1.msra.mxu0 0.0
    %971 = vmatprep.subr.mxu0 0.0
    %972 = vmatpush1.msra.mxu0 0.0
    %973 = vmatprep.subr.mxu0 0.0
    %974 = vmatpush1.msra.mxu0 0.0
    %975 = vmatprep.subr.mxu0 0.0
    %976 = vmatpush1.msra.mxu0 0.0
    %977 = vmatprep.subr.mxu0 0.0
    %978 = vmatpush1.msra.mxu0 0.0
    %979 = vmatprep.subr.mxu0 0.0
    %980 = vmatpush1.msra.mxu0 0.0
    %981 = vmatprep.subr.mxu0 0.0
    %982 = vmatpush1.msra.mxu0 0.0
    %983 = vmatprep.subr.mxu0 0.0
    %984 = vmatpush1.msra.mxu0 0.0
    %985 = vmatprep.subr.mxu0 0.0
    %986 = vmatpush1.msra.mxu0 %v240
    %987 = vmatprep.subr.mxu0 0.0
    %988 = vmatpush1.msra.mxu0 %v239
    %989 = vmatprep.subr.mxu0 0.0
    %990 = vmatpush1.msra.mxu0 %v238
    %991 = vmatprep.subr.mxu0 0.0
    %992 = vmatpush1.msra.mxu0 %v237
    %993 = vmatprep.subr.mxu0 0.0
    %994 = vmatpush2.msra.mxu0 0.0
    %995 = vmatprep.subr.mxu0 0.0
    %996 = vmatpush2.msra.mxu0 0.0
    %997 = vmatprep.subr.mxu0 0.0
    %998 = vmatpush2.msra.mxu0 0.0
    %999 = vmatprep.subr.mxu0 0.0
    %1000 = vmatpush2.msra.mxu0 0.0
    %1001 = vmatprep.subr.mxu0 0.0
    %1002 = vmatpush2.msra.mxu0 0.0
    %1003 = vmatprep.subr.mxu0 0.0
    %1004 = vmatpush2.msra.mxu0 0.0
    %1005 = vmatprep.subr.mxu0 0.0
    %1006 = vmatpush2.msra.mxu0 0.0
    %1007 = vmatprep.subr.mxu0 0.0
    %1008 = vmatpush2.msra.mxu0 0.0
    %1009 = vmatprep.subr.mxu0 0.0
    %1010 = vmatpush2.msra.mxu0 0.0
    %1011 = vmatprep.subr.mxu0 0.0
    %1012 = vmatpush2.msra.mxu0 0.0
    %1013 = vmatprep.subr.mxu0 0.0
    %1014 = vmatpush2.msra.mxu0 0.0
    %1015 = vmatprep.subr.mxu0 0.0
    %1016 = vmatpush2.msra.mxu0 0.0
    %1017 = vmatprep.subr.mxu0 0.0
    %1018 = vmatpush2.msra.mxu0 0.0
    %1019 = vmatprep.subr.mxu0 0.0
    %1020 = vmatpush2.msra.mxu0 0.0
    %1021 = vmatprep.subr.mxu0 0.0
    %1022 = vmatpush2.msra.mxu0 0.0
    %1023 = vmatprep.subr.mxu0 0.0
    %1024 = vmatpush2.msra.mxu0 0.0
    %1025 = vmatprep.mubr.f32.mxu0 0.0
    %1026 = vmatmul.mubr.f32.gmra.mxu0 %v959
    %v1027 = vpop.f32.mrf.mxu0
    %v1028 = vadd.f32 0.0, %v1027
    %v1029 = vpop.f32.mrf.mxu0
    %1030 = vdwg.mxu0
    %v1032 = vrot.slane %v1028, 3
    %v1033 = vrot.slane %v1028, 4
    %v1036 = vadd.f32 %v235, %v1032
    %v1037 = vadd.f32 %v236, %v1033
    %v1038 = vmul.f32 %v1036, 0.5
    %v1039 = vmul.f32 %v1037, 0.5
    %v1040 = vtanh.pop %v1038
    %v1041 = vtanh.pop %v1039
    %v1042 = vadd.f32 %v1040, 1.0
    %v1043 = vadd.f32 %v1041, 1.0
    %v1044 = vmul.f32 %v1042, 0.5
    %v1045 = vmul.f32 %v1043, 0.5
    %v1046 = vtanh.pop %v1036
    %v1047 = vtanh.pop %v1037
    %v1050 = vrot.slane %v929, 7
    %v1051 = vrot.slane %v930, 7
    %v1054 = vmul.f32 %v1044, %v1050
    %v1055 = vmul.f32 %v1045, %v1051
    %1058 = vrot.lane.b32.xlu0 %v1046, 64
    %v1059 = vpop.permute.xlu0 %1058
    %1060 = vrot.lane.b32.xlu0 %v1047, 64
    %v1061 = vpop.permute.xlu0 %1060
    %v1064 = vmul.f32 %v1044, %v1059
    %v1065 = vmul.f32 %v1045, %v1061
    %1068 = vrot.lane.b32.xlu0 %v1064, 32
    %v1069 = vpop.permute.xlu0 %1068
    %1070 = vrot.lane.b32.xlu0 %v1065, 32
    %v1071 = vpop.permute.xlu0 %1070
    %v1074 = vadd.f32 %v1054, %v1069
    %v1075 = vadd.f32 %v1055, %v1071
    %v1076 = vtanh.pop %v1074
    %v1077 = vtanh.pop %v1075
    %1080 = vrot.lane.b32.xlu0 %v1076, 64
    %v1081 = vpop.permute.xlu0 %1080
    %1082 = vrot.lane.b32.xlu0 %v1077, 64
    %v1083 = vpop.permute.xlu0 %1082
    %v1086 = vmul.f32 %v1044, %v1081
    %v1087 = vmul.f32 %v1045, %v1083
    %1090 = vrot.lane.b32.xlu0 %v1086, 32
    %v1091 = vpop.permute.xlu0 %1090
    %1092 = vrot.lane.b32.xlu0 %v1087, 32
    %v1093 = vpop.permute.xlu0 %1092
    %vm1096 = vcmask 259077
    %1097 = vst.msk [vmem:[#allocation2] sm:$0x20] %vm1096, %v1091
    %1098 = vst.msk [vmem:[#allocation2 + $0x8] sm:$0x20] %vm1096, %v1093
    %v1099 = vrot.slane %v1086, 5
    %v1100 = vrot.slane %v1087, 4
    %v1101 = vsel %vm377, %v1100, %v1099
    %1102 = vrot.lane.b32.xlu0 %v1101, 32
    %v1103 = vpop.permute.xlu0 %1102
    %v1104 = vsel %vm241, %v1103, 0
    %1106 = vmatprep.subr.mxu0 0.0
    %1107 = vmatpush1.msra.mxu0 0.0
    %1108 = vmatprep.subr.mxu0 0.0
    %1109 = vmatpush1.msra.mxu0 0.0
    %1110 = vmatprep.subr.mxu0 0.0
    %1111 = vmatpush1.msra.mxu0 0.0
    %1112 = vmatprep.subr.mxu0 0.0
    %1113 = vmatpush1.msra.mxu0 0.0
    %1114 = vmatprep.subr.mxu0 0.0
    %1115 = vmatpush1.msra.mxu0 0.0
    %1116 = vmatprep.subr.mxu0 0.0
    %1117 = vmatpush1.msra.mxu0 0.0
    %1118 = vmatprep.subr.mxu0 0.0
    %1119 = vmatpush1.msra.mxu0 0.0
    %1120 = vmatprep.subr.mxu0 0.0
    %1121 = vmatpush1.msra.mxu0 0.0
    %1122 = vmatprep.subr.mxu0 0.0
    %1123 = vmatpush1.msra.mxu0 0.0
    %1124 = vmatprep.subr.mxu0 0.0
    %1125 = vmatpush1.msra.mxu0 0.0
    %1126 = vmatprep.subr.mxu0 0.0
    %1127 = vmatpush1.msra.mxu0 0.0
    %1128 = vmatprep.subr.mxu0 0.0
    %1129 = vmatpush1.msra.mxu0 0.0
    %1130 = vmatprep.subr.mxu0 0.0
    %1131 = vmatpush1.msra.mxu0 %v240
    %1132 = vmatprep.subr.mxu0 0.0
    %1133 = vmatpush1.msra.mxu0 %v239
    %1134 = vmatprep.subr.mxu0 0.0
    %1135 = vmatpush1.msra.mxu0 %v238
    %1136 = vmatprep.subr.mxu0 0.0
    %1137 = vmatpush1.msra.mxu0 %v237
    %1138 = vmatprep.subr.mxu0 0.0
    %1139 = vmatpush2.msra.mxu0 0.0
    %1140 = vmatprep.subr.mxu0 0.0
    %1141 = vmatpush2.msra.mxu0 0.0
    %1142 = vmatprep.subr.mxu0 0.0
    %1143 = vmatpush2.msra.mxu0 0.0
    %1144 = vmatprep.subr.mxu0 0.0
    %1145 = vmatpush2.msra.mxu0 0.0
    %1146 = vmatprep.subr.mxu0 0.0
    %1147 = vmatpush2.msra.mxu0 0.0
    %1148 = vmatprep.subr.mxu0 0.0
    %1149 = vmatpush2.msra.mxu0 0.0
    %1150 = vmatprep.subr.mxu0 0.0
    %1151 = vmatpush2.msra.mxu0 0.0
    %1152 = vmatprep.subr.mxu0 0.0
    %1153 = vmatpush2.msra.mxu0 0.0
    %1154 = vmatprep.subr.mxu0 0.0
    %1155 = vmatpush2.msra.mxu0 0.0
    %1156 = vmatprep.subr.mxu0 0.0
    %1157 = vmatpush2.msra.mxu0 0.0
    %1158 = vmatprep.subr.mxu0 0.0
    %1159 = vmatpush2.msra.mxu0 0.0
    %1160 = vmatprep.subr.mxu0 0.0
    %1161 = vmatpush2.msra.mxu0 0.0
    %1162 = vmatprep.subr.mxu0 0.0
    %1163 = vmatpush2.msra.mxu0 0.0
    %1164 = vmatprep.subr.mxu0 0.0
    %1165 = vmatpush2.msra.mxu0 0.0
    %1166 = vmatprep.subr.mxu0 0.0
    %1167 = vmatpush2.msra.mxu0 0.0
    %1168 = vmatprep.subr.mxu0 0.0
    %1169 = vmatpush2.msra.mxu0 0.0
    %1170 = vmatprep.mubr.f32.mxu0 0.0
    %1171 = vmatmul.mubr.f32.gmra.mxu0 %v1104
    %v1172 = vpop.f32.mrf.mxu0
    %v1173 = vadd.f32 0.0, %v1172
    %v1174 = vpop.f32.mrf.mxu0
    %1175 = vdwg.mxu0
    %v1177 = vrot.slane %v1173, 2
    %v1178 = vrot.slane %v1173, 3
    %v1181 = vadd.f32 %v235, %v1177
    %v1182 = vadd.f32 %v236, %v1178
    %v1183 = vmul.f32 %v1181, 0.5
    %v1184 = vmul.f32 %v1182, 0.5
    %v1185 = vtanh.pop %v1183
    %v1186 = vtanh.pop %v1184
    %v1187 = vadd.f32 %v1185, 1.0
    %v1188 = vadd.f32 %v1186, 1.0
    %v1189 = vmul.f32 %v1187, 0.5
    %v1190 = vmul.f32 %v1188, 0.5
    %v1191 = vtanh.pop %v1181
    %v1192 = vtanh.pop %v1182
    %v1195 = vrot.slane %v1074, 7
    %v1196 = vrot.slane %v1075, 7
    %v1199 = vmul.f32 %v1189, %v1195
    %v1200 = vmul.f32 %v1190, %v1196
    %1203 = vrot.lane.b32.xlu0 %v1191, 64
    %v1204 = vpop.permute.xlu0 %1203
    %1205 = vrot.lane.b32.xlu0 %v1192, 64
    %v1206 = vpop.permute.xlu0 %1205
    %v1209 = vmul.f32 %v1189, %v1204
    %v1210 = vmul.f32 %v1190, %v1206
    %1213 = vrot.lane.b32.xlu0 %v1209, 32
    %v1214 = vpop.permute.xlu0 %1213
    %1215 = vrot.lane.b32.xlu0 %v1210, 32
    %v1216 = vpop.permute.xlu0 %1215
    %v1219 = vadd.f32 %v1199, %v1214
    %v1220 = vadd.f32 %v1200, %v1216
    %v1221 = vtanh.pop %v1219
    %v1222 = vtanh.pop %v1220
    %1225 = vrot.lane.b32.xlu0 %v1221, 64
    %v1226 = vpop.permute.xlu0 %1225
    %1227 = vrot.lane.b32.xlu0 %v1222, 64
    %v1228 = vpop.permute.xlu0 %1227
    %v1231 = vmul.f32 %v1189, %v1226
    %v1232 = vmul.f32 %v1190, %v1228
    %1235 = vrot.lane.b32.xlu0 %v1231, 32
    %v1236 = vpop.permute.xlu0 %1235
    %1237 = vrot.lane.b32.xlu0 %v1232, 32
    %v1238 = vpop.permute.xlu0 %1237
    %vm1241 = vcmask 260102
    %1242 = vst.msk [vmem:[#allocation2] sm:$0x40] %vm1241, %v1236
    %1243 = vst.msk [vmem:[#allocation2 + $0x8] sm:$0x40] %vm1241, %v1238
    %v1244 = vrot.slane %v1231, 6
    %v1245 = vrot.slane %v1232, 5
    %v1246 = vsel %vm377, %v1245, %v1244
    %1247 = vrot.lane.b32.xlu0 %v1246, 32
    %v1248 = vpop.permute.xlu0 %1247
    %v1249 = vsel %vm241, %v1248, 0
    %1251 = vmatprep.subr.mxu0 0.0
    %1252 = vmatpush1.msra.mxu0 0.0
    %1253 = vmatprep.subr.mxu0 0.0
    %1254 = vmatpush1.msra.mxu0 0.0
    %1255 = vmatprep.subr.mxu0 0.0
    %1256 = vmatpush1.msra.mxu0 0.0
    %1257 = vmatprep.subr.mxu0 0.0
    %1258 = vmatpush1.msra.mxu0 0.0
    %1259 = vmatprep.subr.mxu0 0.0
    %1260 = vmatpush1.msra.mxu0 0.0
    %1261 = vmatprep.subr.mxu0 0.0
    %1262 = vmatpush1.msra.mxu0 0.0
    %1263 = vmatprep.subr.mxu0 0.0
    %1264 = vmatpush1.msra.mxu0 0.0
    %1265 = vmatprep.subr.mxu0 0.0
    %1266 = vmatpush1.msra.mxu0 0.0
    %1267 = vmatprep.subr.mxu0 0.0
    %1268 = vmatpush1.msra.mxu0 0.0
    %1269 = vmatprep.subr.mxu0 0.0
    %1270 = vmatpush1.msra.mxu0 0.0
    %1271 = vmatprep.subr.mxu0 0.0
    %1272 = vmatpush1.msra.mxu0 0.0
    %1273 = vmatprep.subr.mxu0 0.0
    %1274 = vmatpush1.msra.mxu0 0.0
    %1275 = vmatprep.subr.mxu0 0.0
    %1276 = vmatpush1.msra.mxu0 %v240
    %1277 = vmatprep.subr.mxu0 0.0
    %1278 = vmatpush1.msra.mxu0 %v239
    %1279 = vmatprep.subr.mxu0 0.0
    %1280 = vmatpush1.msra.mxu0 %v238
    %1281 = vmatprep.subr.mxu0 0.0
    %1282 = vmatpush1.msra.mxu0 %v237
    %1283 = vmatprep.subr.mxu0 0.0
    %1284 = vmatpush2.msra.mxu0 0.0
    %1285 = vmatprep.subr.mxu0 0.0
    %1286 = vmatpush2.msra.mxu0 0.0
    %1287 = vmatprep.subr.mxu0 0.0
    %1288 = vmatpush2.msra.mxu0 0.0
    %1289 = vmatprep.subr.mxu0 0.0
    %1290 = vmatpush2.msra.mxu0 0.0
    %1291 = vmatprep.subr.mxu0 0.0
    %1292 = vmatpush2.msra.mxu0 0.0
    %1293 = vmatprep.subr.mxu0 0.0
    %1294 = vmatpush2.msra.mxu0 0.0
    %1295 = vmatprep.subr.mxu0 0.0
    %1296 = vmatpush2.msra.mxu0 0.0
    %1297 = vmatprep.subr.mxu0 0.0
    %1298 = vmatpush2.msra.mxu0 0.0
    %1299 = vmatprep.subr.mxu0 0.0
    %1300 = vmatpush2.msra.mxu0 0.0
    %1301 = vmatprep.subr.mxu0 0.0
    %1302 = vmatpush2.msra.mxu0 0.0
    %1303 = vmatprep.subr.mxu0 0.0
    %1304 = vmatpush2.msra.mxu0 0.0
    %1305 = vmatprep.subr.mxu0 0.0
    %1306 = vmatpush2.msra.mxu0 0.0
    %1307 = vmatprep.subr.mxu0 0.0
    %1308 = vmatpush2.msra.mxu0 0.0
    %1309 = vmatprep.subr.mxu0 0.0
    %1310 = vmatpush2.msra.mxu0 0.0
    %1311 = vmatprep.subr.mxu0 0.0
    %1312 = vmatpush2.msra.mxu0 0.0
    %1313 = vmatprep.subr.mxu0 0.0
    %1314 = vmatpush2.msra.mxu0 0.0
    %1315 = vmatprep.mubr.f32.mxu0 0.0
    %1316 = vmatmul.mubr.f32.gmra.mxu0 %v1249
    %v1317 = vpop.f32.mrf.mxu0
    %v1318 = vadd.f32 0.0, %v1317
    %v1319 = vpop.f32.mrf.mxu0
    %1320 = vdwg.mxu0
    %v1322 = vrot.slane %v1318, 1
    %v1323 = vrot.slane %v1318, 2
    %v1326 = vadd.f32 %v235, %v1322
    %v1327 = vadd.f32 %v236, %v1323
    %v1328 = vmul.f32 %v1326, 0.5
    %v1329 = vmul.f32 %v1327, 0.5
    %v1330 = vtanh.pop %v1328
    %v1331 = vtanh.pop %v1329
    %v1332 = vadd.f32 %v1330, 1.0
    %v1333 = vadd.f32 %v1331, 1.0
    %v1334 = vmul.f32 %v1332, 0.5
    %v1335 = vmul.f32 %v1333, 0.5
    %v1336 = vtanh.pop %v1326
    %v1337 = vtanh.pop %v1327
    %v1340 = vrot.slane %v1219, 7
    %v1341 = vrot.slane %v1220, 7
    %v1344 = vmul.f32 %v1334, %v1340
    %v1345 = vmul.f32 %v1335, %v1341
    %1348 = vrot.lane.b32.xlu0 %v1336, 64
    %v1349 = vpop.permute.xlu0 %1348
    %1350 = vrot.lane.b32.xlu0 %v1337, 64
    %v1351 = vpop.permute.xlu0 %1350
    %v1354 = vmul.f32 %v1334, %v1349
    %v1355 = vmul.f32 %v1335, %v1351
    %1358 = vrot.lane.b32.xlu0 %v1354, 32
    %v1359 = vpop.permute.xlu0 %1358
    %1360 = vrot.lane.b32.xlu0 %v1355, 32
    %v1361 = vpop.permute.xlu0 %1360
    %v1364 = vadd.f32 %v1344, %v1359
    %v1365 = vadd.f32 %v1345, %v1361
    %v1366 = vtanh.pop %v1364
    %v1367 = vtanh.pop %v1365
    %1370 = vrot.lane.b32.xlu0 %v1366, 64
    %v1371 = vpop.permute.xlu0 %1370
    %1372 = vrot.lane.b32.xlu0 %v1367, 64
    %v1373 = vpop.permute.xlu0 %1372
    %v1376 = vmul.f32 %v1334, %v1371
    %v1377 = vmul.f32 %v1335, %v1373
    %1380 = vrot.lane.b32.xlu0 %v1376, 32
    %v1381 = vpop.permute.xlu0 %1380
    %1382 = vrot.lane.b32.xlu0 %v1377, 32
    %v1383 = vpop.permute.xlu0 %1382
    %vm1386 = vcmask 261127
    %1387 = vst.msk [vmem:[#allocation2] sm:$0x80] %vm1386, %v1381
    %1388 = vst.msk [vmem:[#allocation2 + $0x8] sm:$0x80] %vm1386, %v1383
    %v1389 = vld [vmem:[#allocation2] sm:$0xff]
    %v1390 = vld [vmem:[#allocation2 + $0x8] sm:$0xff]
    %v1391 = vld [vmem:[#allocation3 + $0x60] sm:$0xff]
    %v1392 = vld [vmem:[#allocation3 + $0x68] sm:$0xff]
    %v1393 = vld [vmem:[#allocation3 + $0x70] sm:$0xff]
    %v1394 = vld [vmem:[#allocation3 + $0x78] sm:$0xff]
    %v1395 = vld [vmem:[#allocation3 + $0x80] sm:$0x1]
    %v1396 = vlaneseq
    %v1397 = vshrl.u32 %v1396, 7
    %v1398 = vsub.s32 0, %v1397
    %v1399 = vrot.slane %v1395, %v1398
    %v1401 = vsel %vm241, %v1389, 0
    %v1404 = vsel %vm241, %v1390, 0
    %1406 = vmatprep.subr.mxu0 0.0
    %1407 = vmatpush1.msra.mxu0 0.0
    %1408 = vmatprep.subr.mxu0 0.0
    %1409 = vmatpush1.msra.mxu0 0.0
    %1410 = vmatprep.subr.mxu0 0.0
    %1411 = vmatpush1.msra.mxu0 0.0
    %1412 = vmatprep.subr.mxu0 0.0
    %1413 = vmatpush1.msra.mxu0 0.0
    %1414 = vmatprep.subr.mxu0 0.0
    %1415 = vmatpush1.msra.mxu0 0.0
    %1416 = vmatprep.subr.mxu0 0.0
    %1417 = vmatpush1.msra.mxu0 0.0
    %1418 = vmatprep.subr.mxu0 0.0
    %1419 = vmatpush1.msra.mxu0 0.0
    %1420 = vmatprep.subr.mxu0 0.0
    %1421 = vmatpush1.msra.mxu0 0.0
    %1422 = vmatprep.subr.mxu0 0.0
    %1423 = vmatpush1.msra.mxu0 0.0
    %1424 = vmatprep.subr.mxu0 0.0
    %1425 = vmatpush1.msra.mxu0 0.0
    %1426 = vmatprep.subr.mxu0 0.0
    %1427 = vmatpush1.msra.mxu0 0.0
    %1428 = vmatprep.subr.mxu0 0.0
    %1429 = vmatpush1.msra.mxu0 0.0
    %1430 = vmatprep.subr.mxu0 0.0
    %1431 = vmatpush1.msra.mxu0 %v1394
    %1432 = vmatprep.subr.mxu0 0.0
    %1433 = vmatpush1.msra.mxu0 %v1393
    %1434 = vmatprep.subr.mxu0 0.0
    %1435 = vmatpush1.msra.mxu0 %v1392
    %1436 = vmatprep.subr.mxu0 0.0
    %1437 = vmatpush1.msra.mxu0 %v1391
    %1438 = vmatprep.subr.mxu0 0.0
    %1439 = vmatpush2.msra.mxu0 0.0
    %1440 = vmatprep.subr.mxu0 0.0
    %1441 = vmatpush2.msra.mxu0 0.0
    %1442 = vmatprep.subr.mxu0 0.0
    %1443 = vmatpush2.msra.mxu0 0.0
    %1444 = vmatprep.subr.mxu0 0.0
    %1445 = vmatpush2.msra.mxu0 0.0
    %1446 = vmatprep.subr.mxu0 0.0
    %1447 = vmatpush2.msra.mxu0 0.0
    %1448 = vmatprep.subr.mxu0 0.0
    %1449 = vmatpush2.msra.mxu0 0.0
    %1450 = vmatprep.subr.mxu0 0.0
    %1451 = vmatpush2.msra.mxu0 0.0
    %1452 = vmatprep.subr.mxu0 0.0
    %1453 = vmatpush2.msra.mxu0 0.0
    %1454 = vmatprep.subr.mxu0 0.0
    %1455 = vmatpush2.msra.mxu0 0.0
    %1456 = vmatprep.subr.mxu0 0.0
    %1457 = vmatpush2.msra.mxu0 0.0
    %1458 = vmatprep.subr.mxu0 0.0
    %1459 = vmatpush2.msra.mxu0 0.0
    %1460 = vmatprep.subr.mxu0 0.0
    %1461 = vmatpush2.msra.mxu0 0.0
    %1462 = vmatprep.subr.mxu0 0.0
    %1463 = vmatpush2.msra.mxu0 0.0
    %1464 = vmatprep.subr.mxu0 0.0
    %1465 = vmatpush2.msra.mxu0 0.0
    %1466 = vmatprep.subr.mxu0 0.0
    %1467 = vmatpush2.msra.mxu0 0.0
    %1468 = vmatprep.subr.mxu0 0.0
    %1469 = vmatpush2.msra.mxu0 0.0
    %1470 = vmatprep.mubr.f32.mxu0 0.0
    %1471 = vmatmul.mubr.f32.gmra.mxu0 %v1401
    %v1472 = vpop.f32.mrf.mxu0
    %v1473 = vadd.f32 %v1399, %v1472
    %v1474 = vpop.f32.mrf.mxu0
    %1475 = vmatprep.mubr.f32.mxu0 0.0
    %1476 = vmatmul.mubr.f32.gmra.mxu0 %v1404
    %v1477 = vpop.f32.mrf.mxu0
    %v1478 = vadd.f32 %v1399, %v1477
    %v1479 = vpop.f32.mrf.mxu0
    %1480 = vdwg.mxu0
    %v1481 = vld [vmem:[#allocation3 + $0x38] sm:$0xff]
    %v1482 = vld [vmem:[#allocation3 + $0x40] sm:$0xff]
    %v1483 = vld [vmem:[#allocation3 + $0x48] sm:$0xff]
    %v1484 = vld [vmem:[#allocation3 + $0x50] sm:$0xff]
    %v1485 = vld [vmem:[#allocation3 + $0x58] sm:$0x1]
    %v1486 = vld [vmem:[#allocation3 + $0x88] sm:$0x1]
    %v1487 = vlaneseq
    %v1488 = vshrl.u32 %v1487, 7
    %v1489 = vsub.s32 0, %v1488
    %v1490 = vrot.slane %v1485, %v1489
    %v1491 = vrot.slane %v1376, 7
    %v1492 = vrot.slane %v1377, 6
    %v1493 = vsel %vm377, %v1492, %v1491
    %1494 = vrot.lane.b32.xlu0 %v1493, 32
    %v1495 = vpop.permute.xlu0 %1494
    %v1496 = vsel %vm241, %v1495, 0
    %1498 = vmatprep.subr.mxu0 0.0
    %1499 = vmatpush1.msra.mxu0 0.0
    %1500 = vmatprep.subr.mxu0 0.0
    %1501 = vmatpush1.msra.mxu0 0.0
    %1502 = vmatprep.subr.mxu0 0.0
    %1503 = vmatpush1.msra.mxu0 0.0
    %1504 = vmatprep.subr.mxu0 0.0
    %1505 = vmatpush1.msra.mxu0 0.0
    %1506 = vmatprep.subr.mxu0 0.0
    %1507 = vmatpush1.msra.mxu0 0.0
    %1508 = vmatprep.subr.mxu0 0.0
    %1509 = vmatpush1.msra.mxu0 0.0
    %1510 = vmatprep.subr.mxu0 0.0
    %1511 = vmatpush1.msra.mxu0 0.0
    %1512 = vmatprep.subr.mxu0 0.0
    %1513 = vmatpush1.msra.mxu0 0.0
    %1514 = vmatprep.subr.mxu0 0.0
    %1515 = vmatpush1.msra.mxu0 0.0
    %1516 = vmatprep.subr.mxu0 0.0
    %1517 = vmatpush1.msra.mxu0 0.0
    %1518 = vmatprep.subr.mxu0 0.0
    %1519 = vmatpush1.msra.mxu0 0.0
    %1520 = vmatprep.subr.mxu0 0.0
    %1521 = vmatpush1.msra.mxu0 0.0
    %1522 = vmatprep.subr.mxu0 0.0
    %1523 = vmatpush1.msra.mxu0 %v1484
    %1524 = vmatprep.subr.mxu0 0.0
    %1525 = vmatpush1.msra.mxu0 %v1483
    %1526 = vmatprep.subr.mxu0 0.0
    %1527 = vmatpush1.msra.mxu0 %v1482
    %1528 = vmatprep.subr.mxu0 0.0
    %1529 = vmatpush1.msra.mxu0 %v1481
    %1530 = vmatprep.subr.mxu0 0.0
    %1531 = vmatpush2.msra.mxu0 0.0
    %1532 = vmatprep.subr.mxu0 0.0
    %1533 = vmatpush2.msra.mxu0 0.0
    %1534 = vmatprep.subr.mxu0 0.0
    %1535 = vmatpush2.msra.mxu0 0.0
    %1536 = vmatprep.subr.mxu0 0.0
    %1537 = vmatpush2.msra.mxu0 0.0
    %1538 = vmatprep.subr.mxu0 0.0
    %1539 = vmatpush2.msra.mxu0 0.0
    %1540 = vmatprep.subr.mxu0 0.0
    %1541 = vmatpush2.msra.mxu0 0.0
    %1542 = vmatprep.subr.mxu0 0.0
    %1543 = vmatpush2.msra.mxu0 0.0
    %1544 = vmatprep.subr.mxu0 0.0
    %1545 = vmatpush2.msra.mxu0 0.0
    %1546 = vmatprep.subr.mxu0 0.0
    %1547 = vmatpush2.msra.mxu0 0.0
    %1548 = vmatprep.subr.mxu0 0.0
    %1549 = vmatpush2.msra.mxu0 0.0
    %1550 = vmatprep.subr.mxu0 0.0
    %1551 = vmatpush2.msra.mxu0 0.0
    %1552 = vmatprep.subr.mxu0 0.0
    %1553 = vmatpush2.msra.mxu0 0.0
    %1554 = vmatprep.subr.mxu0 0.0
    %1555 = vmatpush2.msra.mxu0 0.0
    %1556 = vmatprep.subr.mxu0 0.0
    %1557 = vmatpush2.msra.mxu0 0.0
    %1558 = vmatprep.subr.mxu0 0.0
    %1559 = vmatpush2.msra.mxu0 0.0
    %1560 = vmatprep.subr.mxu0 0.0
    %1561 = vmatpush2.msra.mxu0 0.0
    %1562 = vmatprep.mubr.f32.mxu0 0.0
    %1563 = vmatmul.mubr.f32.gmra.mxu0 %v1496
    %v1564 = vpop.f32.mrf.mxu0
    %v1565 = vadd.f32 %v1490, %v1564
    %v1566 = vpop.f32.mrf.mxu0
    %1567 = vdwg.mxu0
    %v1570 = vunpack.c.l.s4 1966171168
    %v1571 = vunpack.c.0.s8 %v1570
    %v1572 = vlaneseq
    %v1573 = vshrl.u32 %v1572, 7
    %v1574 = vsub.s32 %v1571, %v1573
    %v1575 = vrot.slane %v1565, %v1574
    %v1576 = vcombine.high %v1575, %v1575
    %v1578 = vunpack.c.l.s4 1966171168
    %v1579 = vunpack.c.0.s8 %v1578
    %v1580 = vlaneseq
    %v1581 = vshrl.u32 %v1580, 7
    %v1582 = vsub.s32 %v1579, %v1581
    %v1583 = vrot.slane %v1575, %v1582
    %v1585 = vunpack.c.l.s4 1966171168
    %v1586 = vunpack.c.0.s8 %v1585
    %v1587 = vlaneseq
    %v1588 = vshrl.u32 %v1587, 7
    %v1589 = vsub.s32 %v1586, %v1588
    %v1590 = vrot.slane %v1576, %v1589
    %v1591 = vlaneseq
    %v1592 = vshrl.u32 %v1591, 7
    %v1593 = vsub.s32 0, %v1592
    %v1594 = vrot.slane %v1583, %v1593
    %v1595 = vlaneseq
    %v1596 = vshrl.u32 %v1595, 7
    %v1597 = vsub.s32 0, %v1596
    %v1598 = vrot.slane %v1590, %v1597
    %v1601 = vadd.f32 %v1473, %v1594
    %v1602 = vadd.f32 %v1478, %v1598
    %v1603 = vtanh.pop %v1601
    %v1604 = vtanh.pop %v1602
    %v1605 = vlaneseq
    %v1606 = vshrl.u32 %v1605, 7
    %v1607 = vsub.s32 0, %v1606
    %v1608 = vrot.slane %v1486, %v1607
    %v1609 = vmul.f32 %v1603, %v1608
    %v1610 = vmul.f32 %v1604, %v1608
    %v1611 = vsel %vm241, %v1609, 0.0
    %1612 = vadd.xlane.f32.xlu0 %v1611
    %v1613 = vpop.xlane.xlu0 %1612
    %v1614 = vsel %vm241, %v1610, 0.0
    %1615 = vadd.xlane.f32.xlu0 %v1614
    %v1616 = vpop.xlane.xlu0 %1615
    %v1619 = vlaneseq
    %v1620 = vand.u32 %v1619, 127
    %v1621 = vlaneseq
    %v1622 = vshrl.u32 %v1621, 7
    %v1623 = vsub.s32 %v1620, %v1622
    %v1624 = vrot.slane %v1613, %v1623
    %v1625 = vlaneseq
    %v1626 = vshrl.u32 %v1625, 7
    %v1627 = vsub.s32 %v1620, %v1626
    %v1628 = vrot.slane %v1616, %v1627
    %v1629 = vsel %vm377, %v1628, %v1624
    %vm1631 = vcmask 58368
    %v1632 = vsel %vm1631, %v1629, -inf
    %1633 = vmax.xlane.f32.xlu0 %v1632
    %v1634 = vpop.xlane.xlu0 %1633
    %v1636 = vlaneseq
    %v1637 = vshrl.u32 %v1636, 7
    %v1638 = vsub.s32 0, %v1637
    %v1639 = vrot.slane %v1634, %v1638
    %v1640 = vlaneseq
    %v1641 = vshrl.u32 %v1640, 7
    %v1642 = vsub.s32 1, %v1641
    %v1643 = vrot.slane %v1634, %v1642
    %v1646 = vsub.f32 %v1613, %v1639
    %v1647 = vsub.f32 %v1616, %v1643
    %v1648 = vmul.f32 %v1646, 1.442695
    %v1649 = vpow.pop %v1648
    %v1650 = vmul.f32 %v1647, 1.442695
    %v1651 = vpow.pop %v1650
    %1654 = vset.pattern.permute.xlu0 0
    %1655 = vperm.xlu0 %1654, %v1649
    %v1656 = vpop.permute.xlu0 %1655
    %1657 = vset.pattern.permute.xlu0 0
    %1658 = vperm.xlu0 %1657, %v1651
    %v1659 = vpop.permute.xlu0 %1658
    %v1660 = vlaneseq
    %v1661 = vshrl.u32 %v1660, 7
    %v1662 = vsub.s32 %v1620, %v1661
    %v1663 = vrot.slane %v1656, %v1662
    %v1664 = vlaneseq
    %v1665 = vshrl.u32 %v1664, 7
    %v1666 = vsub.s32 %v1620, %v1665
    %v1667 = vrot.slane %v1659, %v1666
    %v1668 = vsel %vm377, %v1667, %v1663
    %v1670 = vsel %vm1631, %v1668, 0.0
    %1671 = vadd.xlane.f32.xlu0 %v1670
    %v1672 = vpop.xlane.xlu0 %1671
    %v1674 = vlaneseq
    %v1675 = vshrl.u32 %v1674, 7
    %v1676 = vsub.s32 0, %v1675
    %v1677 = vrot.slane %v1672, %v1676
    %v1678 = vlaneseq
    %v1679 = vshrl.u32 %v1678, 7
    %v1680 = vsub.s32 1, %v1679
    %v1681 = vrot.slane %v1672, %v1680
    %v1684 = vrcp.pop %v1677
    %v1685 = vmul.f32 %v1649, %v1684
    %v1686 = vrcp.pop %v1681
    %v1687 = vmul.f32 %v1651, %v1686
    %1689 = vset.pattern.permute.xlu0 0
    %1690 = vperm.xlu0 %1689, %v1685
    %v1691 = vpop.permute.xlu0 %1690
    %1694 = vset.pattern.permute.xlu0 0
    %1695 = vperm.xlu0 %1694, %v1687
    %v1696 = vpop.permute.xlu0 %1695
    %v1698 = vmul.f32 %v1473, %v1691
    %v1699 = vmul.f32 %v1478, %v1696
    %v1700 = vsel %vm241, %v1698, 0.0
    %v1701 = vrot.slane %v1700, 4
    %v1702 = vadd.f32 %v1700, %v1701
    %v1703 = vrot.slane %v1702, 2
    %v1704 = vadd.f32 %v1702, %v1703
    %v1705 = vrot.slane %v1704, 1
    %v1706 = vadd.f32 %v1704, %v1705
    %v1707 = vsel %vm241, %v1699, 0.0
    %v1708 = vrot.slane %v1707, 4
    %v1709 = vadd.f32 %v1707, %v1708
    %v1710 = vrot.slane %v1709, 2
    %v1711 = vadd.f32 %v1709, %v1710
    %v1712 = vrot.slane %v1711, 1
    %v1713 = vadd.f32 %v1711, %v1712
    %v1716 = vsel %vm377, %v1713, %v1706
    %v1717 = vsel %vm241, %v1716, 0
    %1719 = vmatprep.subr.mxu0 0.0
    %1720 = vmatpush1.msra.mxu0 0.0
    %1721 = vmatprep.subr.mxu0 0.0
    %1722 = vmatpush1.msra.mxu0 0.0
    %1723 = vmatprep.subr.mxu0 0.0
    %1724 = vmatpush1.msra.mxu0 0.0
    %1725 = vmatprep.subr.mxu0 0.0
    %1726 = vmatpush1.msra.mxu0 0.0
    %1727 = vmatprep.subr.mxu0 0.0
    %1728 = vmatpush1.msra.mxu0 0.0
    %1729 = vmatprep.subr.mxu0 0.0
    %1730 = vmatpush1.msra.mxu0 0.0
    %1731 = vmatprep.subr.mxu0 0.0
    %1732 = vmatpush1.msra.mxu0 0.0
    %1733 = vmatprep.subr.mxu0 0.0
    %1734 = vmatpush1.msra.mxu0 0.0
    %1735 = vmatprep.subr.mxu0 0.0
    %1736 = vmatpush1.msra.mxu0 0.0
    %1737 = vmatprep.subr.mxu0 0.0
    %1738 = vmatpush1.msra.mxu0 0.0
    %1739 = vmatprep.subr.mxu0 0.0
    %1740 = vmatpush1.msra.mxu0 0.0
    %1741 = vmatprep.subr.mxu0 0.0
    %1742 = vmatpush1.msra.mxu0 0.0
    %1743 = vmatprep.subr.mxu0 0.0
    %1744 = vmatpush1.msra.mxu0 %v1484
    %1745 = vmatprep.subr.mxu0 0.0
    %1746 = vmatpush1.msra.mxu0 %v1483
    %1747 = vmatprep.subr.mxu0 0.0
    %1748 = vmatpush1.msra.mxu0 %v1482
    %1749 = vmatprep.subr.mxu0 0.0
    %1750 = vmatpush1.msra.mxu0 %v1481
    %1751 = vmatprep.subr.mxu0 0.0
    %1752 = vmatpush2.msra.mxu0 0.0
    %1753 = vmatprep.subr.mxu0 0.0
    %1754 = vmatpush2.msra.mxu0 0.0
    %1755 = vmatprep.subr.mxu0 0.0
    %1756 = vmatpush2.msra.mxu0 0.0
    %1757 = vmatprep.subr.mxu0 0.0
    %1758 = vmatpush2.msra.mxu0 0.0
    %1759 = vmatprep.subr.mxu0 0.0
    %1760 = vmatpush2.msra.mxu0 0.0
    %1761 = vmatprep.subr.mxu0 0.0
    %1762 = vmatpush2.msra.mxu0 0.0
    %1763 = vmatprep.subr.mxu0 0.0
    %1764 = vmatpush2.msra.mxu0 0.0
    %1765 = vmatprep.subr.mxu0 0.0
    %1766 = vmatpush2.msra.mxu0 0.0
    %1767 = vmatprep.subr.mxu0 0.0
    %1768 = vmatpush2.msra.mxu0 0.0
    %1769 = vmatprep.subr.mxu0 0.0
    %1770 = vmatpush2.msra.mxu0 0.0
    %1771 = vmatprep.subr.mxu0 0.0
    %1772 = vmatpush2.msra.mxu0 0.0
    %1773 = vmatprep.subr.mxu0 0.0
    %1774 = vmatpush2.msra.mxu0 0.0
    %1775 = vmatprep.subr.mxu0 0.0
    %1776 = vmatpush2.msra.mxu0 0.0
    %1777 = vmatprep.subr.mxu0 0.0
    %1778 = vmatpush2.msra.mxu0 0.0
    %1779 = vmatprep.subr.mxu0 0.0
    %1780 = vmatpush2.msra.mxu0 0.0
    %1781 = vmatprep.subr.mxu0 0.0
    %1782 = vmatpush2.msra.mxu0 0.0
    %1783 = vmatprep.mubr.f32.mxu0 0.0
    %1784 = vmatmul.mubr.f32.gmra.mxu0 %v1717
    %v1785 = vpop.f32.mrf.mxu0
    %v1786 = vadd.f32 %v1490, %v1785
    %v1787 = vpop.f32.mrf.mxu0
    %1788 = vdwg.mxu0
    %v1791 = vunpack.c.l.s4 1966171168
    %v1792 = vunpack.c.0.s8 %v1791
    %v1793 = vlaneseq
    %v1794 = vshrl.u32 %v1793, 7
    %v1795 = vsub.s32 %v1792, %v1794
    %v1796 = vrot.slane %v1786, %v1795
    %v1797 = vcombine.high %v1796, %v1796
    %v1799 = vunpack.c.l.s4 1966171168
    %v1800 = vunpack.c.0.s8 %v1799
    %v1801 = vlaneseq
    %v1802 = vshrl.u32 %v1801, 7
    %v1803 = vsub.s32 %v1800, %v1802
    %v1804 = vrot.slane %v1796, %v1803
    %v1806 = vunpack.c.l.s4 1966171168
    %v1807 = vunpack.c.0.s8 %v1806
    %v1808 = vlaneseq
    %v1809 = vshrl.u32 %v1808, 7
    %v1810 = vsub.s32 %v1807, %v1809
    %v1811 = vrot.slane %v1797, %v1810
    %v1812 = vlaneseq
    %v1813 = vshrl.u32 %v1812, 7
    %v1814 = vsub.s32 0, %v1813
    %v1815 = vrot.slane %v1804, %v1814
    %v1816 = vlaneseq
    %v1817 = vshrl.u32 %v1816, 7
    %v1818 = vsub.s32 0, %v1817
    %v1819 = vrot.slane %v1811, %v1818
    %v1822 = vadd.f32 %v1473, %v1815
    %v1823 = vadd.f32 %v1478, %v1819
    %v1824 = vtanh.pop %v1822
    %v1825 = vtanh.pop %v1823
    %v1826 = vmul.f32 %v1824, %v1608
    %v1827 = vmul.f32 %v1825, %v1608
    %v1828 = vsel %vm241, %v1826, 0.0
    %1829 = vadd.xlane.f32.xlu0 %v1828
    %v1830 = vpop.xlane.xlu0 %1829
    %v1831 = vsel %vm241, %v1827, 0.0
    %1832 = vadd.xlane.f32.xlu0 %v1831
    %v1833 = vpop.xlane.xlu0 %1832
    %v1836 = vlaneseq
    %v1837 = vshrl.u32 %v1836, 7
    %v1838 = vsub.s32 %v1620, %v1837
    %v1839 = vrot.slane %v1830, %v1838
    %v1840 = vlaneseq
    %v1841 = vshrl.u32 %v1840, 7
    %v1842 = vsub.s32 %v1620, %v1841
    %v1843 = vrot.slane %v1833, %v1842
    %v1844 = vsel %vm377, %v1843, %v1839
    %v1846 = vsel %vm1631, %v1844, -inf
    %1847 = vmax.xlane.f32.xlu0 %v1846
    %v1848 = vpop.xlane.xlu0 %1847
    %v1850 = vlaneseq
    %v1851 = vshrl.u32 %v1850, 7
    %v1852 = vsub.s32 0, %v1851
    %v1853 = vrot.slane %v1848, %v1852
    %v1854 = vlaneseq
    %v1855 = vshrl.u32 %v1854, 7
    %v1856 = vsub.s32 1, %v1855
    %v1857 = vrot.slane %v1848, %v1856
    %v1860 = vsub.f32 %v1830, %v1853
    %v1861 = vsub.f32 %v1833, %v1857
    %v1862 = vmul.f32 %v1860, 1.442695
    %v1863 = vpow.pop %v1862
    %v1864 = vmul.f32 %v1861, 1.442695
    %v1865 = vpow.pop %v1864
    %1868 = vset.pattern.permute.xlu0 0
    %1869 = vperm.xlu0 %1868, %v1863
    %v1870 = vpop.permute.xlu0 %1869
    %1871 = vset.pattern.permute.xlu0 0
    %1872 = vperm.xlu0 %1871, %v1865
    %v1873 = vpop.permute.xlu0 %1872
    %v1874 = vlaneseq
    %v1875 = vshrl.u32 %v1874, 7
    %v1876 = vsub.s32 %v1620, %v1875
    %v1877 = vrot.slane %v1870, %v1876
    %v1878 = vlaneseq
    %v1879 = vshrl.u32 %v1878, 7
    %v1880 = vsub.s32 %v1620, %v1879
    %v1881 = vrot.slane %v1873, %v1880
    %v1882 = vsel %vm377, %v1881, %v1877
    %v1884 = vsel %vm1631, %v1882, 0.0
    %1885 = vadd.xlane.f32.xlu0 %v1884
    %v1886 = vpop.xlane.xlu0 %1885
    %v1888 = vlaneseq
    %v1889 = vshrl.u32 %v1888, 7
    %v1890 = vsub.s32 0, %v1889
    %v1891 = vrot.slane %v1886, %v1890
    %v1892 = vlaneseq
    %v1893 = vshrl.u32 %v1892, 7
    %v1894 = vsub.s32 1, %v1893
    %v1895 = vrot.slane %v1886, %v1894
    %v1898 = vrcp.pop %v1891
    %v1899 = vmul.f32 %v1863, %v1898
    %v1900 = vrcp.pop %v1895
    %v1901 = vmul.f32 %v1865, %v1900
    %1903 = vset.pattern.permute.xlu0 0
    %1904 = vperm.xlu0 %1903, %v1899
    %v1905 = vpop.permute.xlu0 %1904
    %1908 = vset.pattern.permute.xlu0 0
    %1909 = vperm.xlu0 %1908, %v1901
    %v1910 = vpop.permute.xlu0 %1909
    %v1912 = vmul.f32 %v1473, %v1905
    %v1913 = vmul.f32 %v1478, %v1910
    %v1914 = vsel %vm241, %v1912, 0.0
    %v1915 = vrot.slane %v1914, 4
    %v1916 = vadd.f32 %v1914, %v1915
    %v1917 = vrot.slane %v1916, 2
    %v1918 = vadd.f32 %v1916, %v1917
    %v1919 = vrot.slane %v1918, 1
    %v1920 = vadd.f32 %v1918, %v1919
    %v1921 = vsel %vm241, %v1913, 0.0
    %v1922 = vrot.slane %v1921, 4
    %v1923 = vadd.f32 %v1921, %v1922
    %v1924 = vrot.slane %v1923, 2
    %v1925 = vadd.f32 %v1923, %v1924
    %v1926 = vrot.slane %v1925, 1
    %v1927 = vadd.f32 %v1925, %v1926
    %v1928 = vld [vmem:[#allocation3 + $0x90] sm:$0xff]
    %v1929 = vld [vmem:[#allocation3 + $0x98] sm:$0xff]
    %v1930 = vld [vmem:[#allocation3 + $0xa0] sm:$0xff]
    %v1931 = vld [vmem:[#allocation3 + $0xa8] sm:$0xff]
    %v1934 = vsel %vm377, %v1927, %v1920
    %v1935 = vsel %vm241, %v1934, 0
    %1937 = vmatprep.subr.mxu0 0.0
    %1938 = vmatpush1.msra.mxu0 0.0
    %1939 = vmatprep.subr.mxu0 0.0
    %1940 = vmatpush1.msra.mxu0 0.0
    %1941 = vmatprep.subr.mxu0 0.0
    %1942 = vmatpush1.msra.mxu0 0.0
    %1943 = vmatprep.subr.mxu0 0.0
    %1944 = vmatpush1.msra.mxu0 0.0
    %1945 = vmatprep.subr.mxu0 0.0
    %1946 = vmatpush1.msra.mxu0 0.0
    %1947 = vmatprep.subr.mxu0 0.0
    %1948 = vmatpush1.msra.mxu0 0.0
    %1949 = vmatprep.subr.mxu0 0.0
    %1950 = vmatpush1.msra.mxu0 0.0
    %1951 = vmatprep.subr.mxu0 0.0
    %1952 = vmatpush1.msra.mxu0 0.0
    %1953 = vmatprep.subr.mxu0 0.0
    %1954 = vmatpush1.msra.mxu0 0.0
    %1955 = vmatprep.subr.mxu0 0.0
    %1956 = vmatpush1.msra.mxu0 0.0
    %1957 = vmatprep.subr.mxu0 0.0
    %1958 = vmatpush1.msra.mxu0 0.0
    %1959 = vmatprep.subr.mxu0 0.0
    %1960 = vmatpush1.msra.mxu0 0.0
    %1961 = vmatprep.subr.mxu0 0.0
    %1962 = vmatpush1.msra.mxu0 %v1931
    %1963 = vmatprep.subr.mxu0 0.0
    %1964 = vmatpush1.msra.mxu0 %v1930
    %1965 = vmatprep.subr.mxu0 0.0
    %1966 = vmatpush1.msra.mxu0 %v1929
    %1967 = vmatprep.subr.mxu0 0.0
    %1968 = vmatpush1.msra.mxu0 %v1928
    %1969 = vmatprep.subr.mxu0 0.0
    %1970 = vmatpush2.msra.mxu0 0.0
    %1971 = vmatprep.subr.mxu0 0.0
    %1972 = vmatpush2.msra.mxu0 0.0
    %1973 = vmatprep.subr.mxu0 0.0
    %1974 = vmatpush2.msra.mxu0 0.0
    %1975 = vmatprep.subr.mxu0 0.0
    %1976 = vmatpush2.msra.mxu0 0.0
    %1977 = vmatprep.subr.mxu0 0.0
    %1978 = vmatpush2.msra.mxu0 0.0
    %1979 = vmatprep.subr.mxu0 0.0
    %1980 = vmatpush2.msra.mxu0 0.0
    %1981 = vmatprep.subr.mxu0 0.0
    %1982 = vmatpush2.msra.mxu0 0.0
    %1983 = vmatprep.subr.mxu0 0.0
    %1984 = vmatpush2.msra.mxu0 0.0
    %1985 = vmatprep.subr.mxu0 0.0
    %1986 = vmatpush2.msra.mxu0 0.0
    %1987 = vmatprep.subr.mxu0 0.0
    %1988 = vmatpush2.msra.mxu0 0.0
    %1989 = vmatprep.subr.mxu0 0.0
    %1990 = vmatpush2.msra.mxu0 0.0
    %1991 = vmatprep.subr.mxu0 0.0
    %1992 = vmatpush2.msra.mxu0 0.0
    %1993 = vmatprep.subr.mxu0 0.0
    %1994 = vmatpush2.msra.mxu0 0.0
    %1995 = vmatprep.subr.mxu0 0.0
    %1996 = vmatpush2.msra.mxu0 0.0
    %1997 = vmatprep.subr.mxu0 0.0
    %1998 = vmatpush2.msra.mxu0 0.0
    %1999 = vmatprep.subr.mxu0 0.0
    %2000 = vmatpush2.msra.mxu0 0.0
    %2001 = vmatprep.mubr.f32.mxu0 0.0
    %2002 = vmatmul.mubr.f32.gmra.mxu0 %v1935
    %v2003 = vpop.f32.mrf.mxu0
    %v2004 = vadd.f32 0.0, %v2003
    %v2005 = vpop.f32.mrf.mxu0
    %2006 = vdwg.mxu0
    %v2007 = vmax.f32 %v2004, 0.0
    %v2008 = vld [vmem:[#allocation3 + $0xb0] sm:$0x1]
    %v2009 = vlaneseq
    %v2010 = vshrl.u32 %v2009, 7
    %v2011 = vsub.s32 0, %v2010
    %v2012 = vrot.slane %v2008, %v2011
    %v2013 = vmul.f32 %v2007, %v2012
    %vm2014 = vcmask 254976
    %v2015 = vsel %vm2014, %v2013, 0.0
    %2016 = vadd.xlane.f32.xlu0 %v2015
    %v2017 = vpop.xlane.xlu0 %2016
    %vm2018 = vcmask 1024
    %2019 = vst.msk [vmem:[%s3] sm:$0x3] %vm2018, %v2017
    // Predicated region
    $region18: #{tpu_custom_call.1} parent=1 // pred_check
      _
    $region19: #{tpu_custom_call.1} parent=1 // pred_check_branch
      %2021 = sbr.rel (0) target = $region21
    $region20: #{tpu_custom_call.1} parent=1 // pred_region
      _
    $region21: #{tpu_custom_call.1} parent=1 // pred_fallthru
      _
    // Predicated region
    $region22: #{tpu_custom_call.1} parent=1 // pred_check
      _
    $region23: #{tpu_custom_call.1} parent=1 // pred_check_branch
      %2023 = sbr.rel (0) target = $region25
    $region24: #{tpu_custom_call.1} parent=1 // pred_region
      _
    $region25: #{tpu_custom_call.1} parent=1 // pred_fallthru
      _
    %2024 = vsyncpa [#allocation4], 1

</llo_original>
